<compile_context>
chip_gen: v5e
topology: v5e:2x2
jax: 0.10.0
libtpu: 0.0.40
codegen_flags: <defaults>
</compile_context>

<pallas_src>
import jax
import jax.numpy as jnp
from jax import lax
from jax.experimental import pallas as pl
from jax.experimental.pallas import tpu as pltpu


_NEG_INF = -1e9
_CHUNK_BYTES = 64 * 1024  # live-set budget for the sender running-max (f32 bytes)


def _sender_chunk(n, h):
  """Largest divisor of n whose (chunk, n, h) f32 slab fits the live-set budget."""
  sc = n
  while sc > 1 and sc * n * h * 4 > _CHUNK_BYTES:
    sc -= 1
    while sc > 1 and n % sc != 0:
      sc -= 1
  return max(sc, 1)


# ---------------------------------------------------------------------------
# Fused Pallas kernel: all message-passing steps for one batch block.
# grid = (num_batch_blocks, nb_mp_steps); hidden/output state carried in VMEM.
# ---------------------------------------------------------------------------
def net_fused_kernel(lens_ref, wdec2_ref,                        # SMEM scalar prefetch
                     pos_ref, hint_ref, ew_ref, wrows_ref,
                     whid_ref, wagg_ref, wnxt_ref,               # VMEM inputs
                     out_ref,                                    # VMEM output (resident)
                     hid_ref, acc_ref, edge_ref):                # VMEM scratch
  blk = pl.program_id(0)
  t = pl.program_id(1)
  rows, H = hid_ref.shape                  # rows = Bb * N (batch folded into rows)
  Bb, N = edge_ref.shape[0], edge_ref.shape[1]
  nb = hint_ref.shape[1]                   # number of message-passing steps
  lpad = out_ref.shape[2]                  # lane-padded output width (>= 2*nb)
  sc = _sender_chunk(N, H)
  n_chunks = N // sc

  # ---- per-block init: zero carries + cache the step-invariant edge term ----
  @pl.when(t == 0)
  def _init():
    hid_ref[...] = jnp.zeros_like(hid_ref)
    acc_ref[...] = jnp.zeros_like(acc_ref)
    out_ref[...] = jnp.zeros_like(out_ref)
    e4 = wrows_ref[6:7, :].reshape(1, 1, H)                     # enc_edge @ W_e
    eye = (lax.broadcasted_iota(jnp.int32, (N, N), 0) ==
           lax.broadcasted_iota(jnp.int32, (N, N), 1))
    for b in range(Bb):                    # static loop over batch-in-block
      ew_b = ew_ref[0, b]                                       # (N, N)
      bias_b = jnp.where(jnp.logical_or(ew_b > 0.0, eye), 0.0, _NEG_INF)
      for c in range(n_chunks):            # chunked so no (N,N,H) lives at once
        s = slice(c * sc, (c + 1) * sc)
        edge_ref[b, s, :, :] = ew_b[s, :, None] * e4 + bias_b[s, :, None]

  # ---- encoded features for this step (rank-1 encoder algebra) --------------
  pos = pos_ref[0]                                              # (rows, 1)
  hint = hint_ref[0, pl.ds(t, 1), :, :].reshape(rows, 1)        # (rows, 1)

  p0 = wrows_ref[0:1, :]; q0 = wrows_ref[1:2, :]                # node -> msg_1
  p2 = wrows_ref[2:3, :]; q2 = wrows_ref[3:4, :]                # node -> msg_2
  p5 = wrows_ref[4:5, :]; q5 = wrows_ref[5:6, :]                # node -> o1

  # ---- single fused bf16 MXU matmul for all hidden-dependent linear maps ----
  hidden = hid_ref[...]                                         # (rows, H) f32
  hid_all = jnp.dot(hidden.astype(jnp.bfloat16), whid_ref[...],
                    preferred_element_type=jnp.float32)         # (rows, 3H+2)

  msg_1 = pos * p0 + hint * q0 + hid_all[:, 0:H]                # (rows, H)
  msg_2 = pos * p2 + hint * q2 + hid_all[:, H:2 * H]            # (rows, H)
  h1 = pos * p5 + hint * q5 + hid_all[:, 2 * H:3 * H]           # (rows, H)
  hid_dec = hid_all[:, 3 * H:3 * H + 2]                         # (rows, 2)

  # ---- max aggregation: running max over sender chunks (f32, cached edges) --
  agg_parts = []
  for b in range(Bb):
    msg2_b = msg_2[b * N:(b + 1) * N]                           # (N, H)
    agg_b = jnp.max(msg2_b[0:sc][:, None, :] + edge_ref[b, 0:sc, :, :], axis=0)
    for c in range(1, n_chunks):
      s = slice(c * sc, (c + 1) * sc)
      agg_b = jnp.maximum(
          agg_b, jnp.max(msg2_b[s][:, None, :] + edge_ref[b, s, :, :], axis=0))
    agg_parts.append(agg_b)
  agg = msg_1 + (agg_parts[0] if Bb == 1 else
                 jnp.concatenate(agg_parts, axis=0))            # (rows, H)

  # ---- processor update ------------------------------------------------------
  h2 = jnp.dot(agg.astype(jnp.bfloat16), wagg_ref[...],
               preferred_element_type=jnp.float32)
  nxt_hidden = jnp.maximum(h1 + h2, 0.0)                        # (rows, H)

  # ---- node-scalar decoders on h_t = [node_fts, hidden, nxt_hidden] ----------
  nxt_dec = jnp.dot(nxt_hidden.astype(jnp.bfloat16), wnxt_ref[...],
                    preferred_element_type=jnp.float32)         # (rows, 2)
  out_cand = (wdec2_ref[0] * pos + wdec2_ref[1] * hint
              + hid_dec[:, 0:1] + nxt_dec[:, 0:1])              # (rows, 1)
  hint_pred = (wdec2_ref[2] * pos + wdec2_ref[3] * hint
               + hid_dec[:, 1:2] + nxt_dec[:, 1:2])             # (rows, 1)

  # ---- is_not_done output merge: scalar keep per batch element (SMEM path) ---
  step_f = (t + 1).astype(jnp.float32)
  for b in range(Bb):
    r = slice(b * N, (b + 1) * N)
    keep = jnp.where(t == 0, 1.0,
                     (lens_ref[blk * Bb + b] > step_f).astype(jnp.float32))
    acc_ref[r, :] = keep * out_cand[r] + (1.0 - keep) * acc_ref[r, :]

  hid_ref[...] = nxt_hidden

  # ---- lane-packed write into the VMEM-resident output tile ------------------
  # lane t           <- hint prediction at step t
  # lane nb + t      <- running (masked) output after step t
  lane = lax.broadcasted_iota(jnp.int32, (rows, lpad), 1)
  cur = out_ref[0]
  cur = jnp.where(lane == t, hint_pred, cur)
  cur = jnp.where(lane == nb + t, acc_ref[...], cur)
  out_ref[0] = cur
  # The HBM writeback of this lane-dense tile happens once per batch block
  # (output block index is constant across the time axis).


# ---------------------------------------------------------------------------
# pallas_call wrapper (whole message-passing scan in a single launch).
# ---------------------------------------------------------------------------
def net_scan_fused(lengths, wdec2, pos_blk, hints_blk, ew_blk,
                   wrows, whid, wagg, wnxt, *, lpad):
  nblk, rows, _ = pos_blk.shape
  nb = hints_blk.shape[1]
  Bb, N = ew_blk.shape[1], ew_blk.shape[2]
  H = wagg.shape[0]

  # Explicit VMEM budget (clamped so it is safe on v5e/v6e/v7x scoped limits).
  per_block_in = (pos_blk.size + hints_blk.size + ew_blk.size) * 4 // nblk
  weights = wrows.size * 4 + (whid.size + wagg.size + wnxt.size) * 2
  out_tile = rows * lpad * 4
  scratch = (rows * H + rows + Bb * N * N * H) * 4
  est = 2 * (per_block_in + weights + out_tile) + scratch
  vmem_limit = int(min(max(4 * est, 16 * 2**20), 32 * 2**20))

  return pl.pallas_call(
      net_fused_kernel,
      out_shape=jax.ShapeDtypeStruct((nblk, rows, lpad), jnp.float32),
      grid_spec=pltpu.PrefetchScalarGridSpec(
          num_scalar_prefetch=2,                      # lengths, node-decoder scalars
          grid=(nblk, nb),
          in_specs=[
              pl.BlockSpec((1, rows, 1), lambda blk, t, lens, wd: (blk, 0, 0)),
              pl.BlockSpec((1, nb, rows, 1),
                           lambda blk, t, lens, wd: (blk, 0, 0, 0)),
              pl.BlockSpec((1, Bb, N, N),
                           lambda blk, t, lens, wd: (blk, 0, 0, 0)),
              pl.BlockSpec(wrows.shape, lambda blk, t, lens, wd: (0, 0)),
              pl.BlockSpec(whid.shape, lambda blk, t, lens, wd: (0, 0)),
              pl.BlockSpec(wagg.shape, lambda blk, t, lens, wd: (0, 0)),
              pl.BlockSpec(wnxt.shape, lambda blk, t, lens, wd: (0, 0)),
          ],
          out_specs=pl.BlockSpec((1, rows, lpad),
                                 lambda blk, t, lens, wd: (blk, 0, 0)),
          scratch_shapes=[
              pltpu.VMEM((rows, H), jnp.float32),       # carried hidden state
              pltpu.VMEM((rows, 1), jnp.float32),       # running masked output
              pltpu.VMEM((Bb, N, N, H), jnp.float32),   # cached edge term + adj mask
          ],
      ),
      compiler_params=pltpu.CompilerParams(
          dimension_semantics=("parallel", "arbitrary"),
          vmem_limit_bytes=vmem_limit),
  )(lengths, wdec2, pos_blk, hints_blk, ew_blk, wrows, whid, wagg, wnxt)


# ---------------------------------------------------------------------------
# Net.forward equivalent.
# ---------------------------------------------------------------------------
def net_forward(params, pos, ew, hints, lengths,
                return_hints=True, return_all_outputs=False):
  """hints: (T, B, N, 1); nb_mp_steps = max(1, T - 1) as in Net.forward."""
  T = hints.shape[0]
  nb = max(1, T - 1)
  B, N, _ = pos.shape
  wvec = params["wvec"].astype(jnp.float32)
  wmat = params["wmat"].astype(jnp.float32)
  H = wmat.shape[-1]

  # TODO(synk): LSTM state path (use_lstm=True) not implemented; use_lstm=False here.

  # >=2 parallel batch blocks when possible so both v7x TensorCores are fed;
  # within a block the batch is folded into the MXU row dimension.
  nblk = 2 if (B % 2 == 0 and B >= 2) else 1
  Bb = B // nblk
  rows = Bb * N
  lpad = max(128, -(-2 * nb // 128) * 128)     # lane-dense output width

  # --- once-per-forward rank-1 pre-contractions (tiny host/XLA work) ----------
  enc_pos, enc_hint, enc_edge = wvec[0:1], wvec[1:2], wvec[2:3]
  wrows = jnp.concatenate([
      enc_pos @ wmat[0], enc_hint @ wmat[0],     # node_fts -> msg_1
      enc_pos @ wmat[2], enc_hint @ wmat[2],     # node_fts -> msg_2
      enc_pos @ wmat[5], enc_hint @ wmat[5],     # node_fts -> o1
      enc_edge @ wmat[4],                        # edge_fts -> msg_e
      jnp.zeros((1, H), jnp.float32),
  ], axis=0)                                     # (8, H) f32

  dec2 = jnp.stack([wvec[4], wvec[7]], axis=1)   # hidden -> [out, hint] decoders
  whid = jnp.concatenate([wmat[1], wmat[3], wmat[6], dec2],
                         axis=1).astype(jnp.bfloat16)            # (H, 3H+2)
  wagg = wmat[7].astype(jnp.bfloat16)                            # (H, H)
  wnxt = jnp.stack([wvec[5], wvec[8]], axis=1).astype(jnp.bfloat16)  # (H, 2)
  wdec2 = jnp.stack([jnp.vdot(wvec[0], wvec[3]), jnp.vdot(wvec[1], wvec[3]),
                     jnp.vdot(wvec[0], wvec[6]), jnp.vdot(wvec[1], wvec[6])]
                    ).astype(jnp.float32)                        # (4,) SMEM scalars

  pos_blk = pos.reshape(nblk, rows, 1).astype(jnp.float32)
  hints_blk = jnp.transpose(hints[:nb], (1, 0, 2, 3))            # (B, nb, N, 1)
  hints_blk = hints_blk.reshape(nblk, Bb, nb, N, 1)
  hints_blk = jnp.transpose(hints_blk, (0, 2, 1, 3, 4)).reshape(nblk, nb, rows, 1)
  hints_blk = hints_blk.astype(jnp.float32)
  ew_blk = ew.reshape(nblk, Bb, N, N).astype(jnp.float32)
  lengths_f = jnp.asarray(lengths, jnp.float32)

  res = net_scan_fused(lengths_f, wdec2, pos_blk, hints_blk, ew_blk,
                       wrows, whid, wagg, wnxt, lpad=lpad)       # (nblk, rows, lpad)

  res = res.reshape(nblk, Bb, N, lpad).reshape(B, N, lpad)
  hint_seq = jnp.transpose(res[:, :, 0:nb], (2, 0, 1))           # (nb, B, N)
  out_seq = jnp.transpose(res[:, :, nb:2 * nb], (2, 0, 1))       # (nb, B, N)

  outs = {"out": out_seq if return_all_outputs else out_seq[nb - 1]}
  hint_preds = ([{"h": hint_seq[i]} for i in range(nb)] if return_hints else None)
  return outs, hint_preds


# ---------------------------------------------------------------------------
# Pure-JAX reference of the same synthetic Net (for a correctness check).
# ---------------------------------------------------------------------------
def net_forward_reference(params, pos, ew, adj, hints, lengths):
  wvec, wmat = params["wvec"], params["wmat"]
  T = hints.shape[0]
  nb_mp_steps = max(1, T - 1)
  B, N, _ = pos.shape
  H = wmat.shape[-1]
  hidden = jnp.zeros((B, N, H), jnp.float32)
  output_preds = None
  hint_list = []
  for i in range(nb_mp_steps):
    hint = hints[i]
    node_fts = pos * wvec[0] + hint * wvec[1]                    # (B, N, H)
    edge_fts = ew[..., None] * wvec[2]                           # (B, N, N, H)
    msg_1 = node_fts @ wmat[0] + hidden @ wmat[1]
    msg_2 = node_fts @ wmat[2] + hidden @ wmat[3]
    msg_e = edge_fts @ wmat[4]
    msgs = msg_1[:, None, :, :] + msg_2[:, :, None, :] + msg_e
    maxarg = jnp.where(adj[..., None] > 0, msgs, -1e9)
    agg = jnp.max(maxarg, axis=1)
    h1 = node_fts @ wmat[5] + hidden @ wmat[6]
    h2 = agg @ wmat[7]
    nxt_hidden = jnp.maximum(h1 + h2, 0.0)
    out_cand = node_fts @ wvec[3] + hidden @ wvec[4] + nxt_hidden @ wvec[5]
    hint_pred = node_fts @ wvec[6] + hidden @ wvec[7] + nxt_hidden @ wvec[8]
    if i == 0:
      output_preds = out_cand
    else:
      nd = (lengths > i + 1).astype(jnp.float32)[:, None]
      output_preds = nd * out_cand + (1.0 - nd) * output_preds
    hint_list.append(hint_pred)
    hidden = nxt_hidden
  return output_preds, hint_list


# ---------------------------------------------------------------------------
# Deterministic parameter construction.
# ---------------------------------------------------------------------------
def make_params(key, hidden_dim):
  k1, k2 = jax.random.split(key)
  wvec = 0.1 * jax.random.normal(k1, (9, hidden_dim), jnp.float32)
  wmat = (0.1 / jnp.sqrt(hidden_dim)) * jax.random.normal(
      k2, (8, hidden_dim, hidden_dim), jnp.float32)
  return {"wvec": wvec, "wmat": wmat}


if __name__ == "__main__":
  B, N, H, T = 4, 8, 32, 4       # batch, nodes, hidden_dim, hint time steps
  key = jax.random.PRNGKey(0)
  kp, k1, k2, k3 = jax.random.split(key, 4)

  params = make_params(kp, H)

  pos = jax.random.uniform(k1, (B, N, 1), jnp.float32)                 # NODE input
  a_edge = (jax.random.uniform(k2, (B, N, N), jnp.float32) > 0.5
            ).astype(jnp.float32)                                      # EDGE input
  eye = jnp.broadcast_to(jnp.eye(N, dtype=jnp.float32), (B, N, N))
  adj = jnp.minimum(eye + a_edge, 1.0)                                 # accum_adj_mat
  hints = jax.random.uniform(k3, (T, B, N, 1), jnp.float32)            # NODE hint
  lengths = jnp.array([4.0, 2.0, 3.0, 4.0], jnp.float32)

  outs, hint_preds = net_forward(params, pos, a_edge, hints, lengths,
                                 return_hints=True, return_all_outputs=False)
  jax.block_until_ready(outs["out"])
  for hp in hint_preds:
    jax.block_until_ready(hp["h"])

  assert outs["out"].shape == (B, N)
  assert len(hint_preds) == T - 1 and hint_preds[0]["h"].shape == (B, N)

  ref_out, ref_hints = net_forward_reference(params, pos, a_edge, adj, hints, lengths)
  assert jnp.allclose(outs["out"], ref_out, atol=2e-2, rtol=2e-2)
  for hp, rh in zip(hint_preds, ref_hints):
    assert jnp.allclose(hp["h"], rh, atol=2e-2, rtol=2e-2)

  print("KERNEL_OK")
</pallas_src>

<mosaic_0001>
module attributes {stable_mosaic.version = 11 : i64} {
  func.func @net_fused_kernel(%arg0: i32, %arg1: i32, %arg2: memref<4xf32, #tpu.memory_space<smem>>, %arg3: memref<4xf32, #tpu.memory_space<smem>>, %arg4: memref<1x16x1xf32, #tpu.memory_space<vmem>>, %arg5: memref<1x3x16x1xf32, #tpu.memory_space<vmem>>, %arg6: memref<1x2x8x8xf32, #tpu.memory_space<vmem>>, %arg7: memref<8x32xf32, #tpu.memory_space<vmem>>, %arg8: memref<32x98xbf16, #tpu.memory_space<vmem>>, %arg9: memref<32x32xbf16, #tpu.memory_space<vmem>>, %arg10: memref<32x2xbf16, #tpu.memory_space<vmem>>, %arg11: memref<1x16x128xf32, #tpu.memory_space<vmem>>, %arg12: memref<16x32xf32, #tpu.memory_space<vmem>>, %arg13: memref<16x1xf32, #tpu.memory_space<vmem>>, %arg14: memref<2x8x8x32xf32, #tpu.memory_space<vmem>>) attributes {dimension_semantics = [#tpu.dimension_semantics<parallel>, #tpu.dimension_semantics<arbitrary>], iteration_bounds = array<i64: 2, 3>, scalar_prefetch = 2 : i64, scratch_operands = 3 : i64, tpu.core_type = #tpu.core_type<tc>, window_params = [{transform_indices = @transform_0, window_bounds = array<i64: 1, 16, 1>}, {transform_indices = @transform_1, window_bounds = array<i64: 1, 3, 16, 1>}, {transform_indices = @transform_2, window_bounds = array<i64: 1, 2, 8, 8>}, {pipeline_mode = #tpu.pipeline_mode<synchronous>, transform_indices = @transform_3, window_bounds = array<i64: 8, 32>}, {pipeline_mode = #tpu.pipeline_mode<synchronous>, transform_indices = @transform_4, window_bounds = array<i64: 32, 98>}, {pipeline_mode = #tpu.pipeline_mode<synchronous>, transform_indices = @transform_5, window_bounds = array<i64: 32, 32>}, {pipeline_mode = #tpu.pipeline_mode<synchronous>, transform_indices = @transform_6, window_bounds = array<i64: 32, 2>}, {transform_indices = @transform_7, window_bounds = array<i64: 1, 16, 128>}]} {
    %c0_i32 = arith.constant 0 : i32
    %0 = arith.cmpi eq, %arg1, %c0_i32 : i32
    %1 = arith.extui %0 : i1 to i32
    %c0_i32_0 = arith.constant 0 : i32
    %2 = arith.cmpi ne, %1, %c0_i32_0 : i32
    scf.if %2 {
      %cst_64 = arith.constant 0.000000e+00 : f32
      %151 = vector.broadcast %cst_64 : f32 to vector<16x32xf32>
      %c0_65 = arith.constant 0 : index
      %c0_66 = arith.constant 0 : index
      %152 = vector.load %arg12[%c0_65, %c0_66] : memref<16x32xf32, #tpu.memory_space<vmem>>, vector<16x32xf32>
      tpu.vector_store %arg12[%c0_65, %c0_66], %151 {strides = array<i32>} : memref<16x32xf32, #tpu.memory_space<vmem>>, vector<16x32xf32>,
      %cst_67 = arith.constant 0.000000e+00 : f32
      %153 = vector.broadcast %cst_67 : f32 to vector<16x1xf32>
      %c0_68 = arith.constant 0 : index
      %c0_69 = arith.constant 0 : index
      %154 = vector.load %arg13[%c0_68, %c0_69] : memref<16x1xf32, #tpu.memory_space<vmem>>, vector<16x1xf32>
      tpu.vector_store %arg13[%c0_68, %c0_69], %153 {strides = array<i32>} : memref<16x1xf32, #tpu.memory_space<vmem>>, vector<16x1xf32>,
      %cst_70 = arith.constant 0.000000e+00 : f32
      %155 = vector.broadcast %cst_70 : f32 to vector<1x16x128xf32>
      %c0_71 = arith.constant 0 : index
      %c0_72 = arith.constant 0 : index
      %c0_73 = arith.constant 0 : index
      %156 = vector.load %arg11[%c0_71, %c0_72, %c0_73] : memref<1x16x128xf32, #tpu.memory_space<vmem>>, vector<1x16x128xf32>
      tpu.vector_store %arg11[%c0_71, %c0_72, %c0_73], %155 {strides = array<i32>} : memref<1x16x128xf32, #tpu.memory_space<vmem>>, vector<1x16x128xf32>,
      %c6 = arith.constant 6 : index
      %c0_74 = arith.constant 0 : index
      %157 = vector.load %arg7[%c6, %c0_74] : memref<8x32xf32, #tpu.memory_space<vmem>>, vector<1x32xf32>
      %158 = vector.shape_cast %157 : vector<1x32xf32> to vector<1x1x32xf32>
      %159 = tpu.iota {dimensions = array<i32: 0>} : vector<8x8xi32>
      %160 = tpu.iota {dimensions = array<i32: 1>} : vector<8x8xi32>
      %161 = arith.cmpi eq, %159, %160 : vector<8x8xi32>
      %c0_75 = arith.constant 0 : index
      %c0_76 = arith.constant 0 : index
      %c0_77 = arith.constant 0 : index
      %c0_78 = arith.constant 0 : index
      %162 = vector.load %arg6[%c0_75, %c0_76, %c0_77, %c0_78] : memref<1x2x8x8xf32, #tpu.memory_space<vmem>>, vector<1x1x8x8xf32>
      %163 = vector.shape_cast %162 : vector<1x1x8x8xf32> to vector<8x8xf32>
      %cst_79 = arith.constant 0.000000e+00 : f32
      %164 = vector.broadcast %cst_79 : f32 to vector<8x8xf32>
      %165 = arith.cmpf ogt, %163, %164 : vector<8x8xf32>
      %166 = arith.ori %165, %161 : vector<8x8xi1>
      %cst_80 = arith.constant 0.000000e+00 : f32
      %cst_81 = arith.constant -1.000000e+09 : f32
      %167 = vector.broadcast %cst_80 : f32 to vector<8x8xf32>
      %168 = vector.broadcast %cst_81 : f32 to vector<8x8xf32>
      %169 = arith.select %166, %167, %168 : vector<8x8xi1>, vector<8x8xf32>
      %170 = vector.shape_cast %163 : vector<8x8xf32> to vector<8x8x1xf32>
      %171 = vector.broadcast %170 : vector<8x8x1xf32> to vector<8x8x32xf32>
      %172 = vector.broadcast %158 : vector<1x1x32xf32> to vector<8x8x32xf32>
      %173 = arith.mulf %171, %172 : vector<8x8x32xf32>
      %174 = vector.shape_cast %169 : vector<8x8xf32> to vector<8x8x1xf32>
      %175 = vector.broadcast %174 : vector<8x8x1xf32> to vector<8x8x32xf32>
      %176 = arith.addf %173, %175 : vector<8x8x32xf32>
      %c0_82 = arith.constant 0 : index
      %c0_83 = arith.constant 0 : index
      %c0_84 = arith.constant 0 : index
      %c0_85 = arith.constant 0 : index
      %177 = vector.load %arg14[%c0_82, %c0_83, %c0_84, %c0_85] : memref<2x8x8x32xf32, #tpu.memory_space<vmem>>, vector<1x8x8x32xf32>
      %178 = vector.shape_cast %177 : vector<1x8x8x32xf32> to vector<8x8x32xf32>
      %179 = vector.shape_cast %176 : vector<8x8x32xf32> to vector<1x8x8x32xf32>
      tpu.vector_store %arg14[%c0_82, %c0_83, %c0_84, %c0_85], %179 {strides = array<i32>} : memref<2x8x8x32xf32, #tpu.memory_space<vmem>>, vector<1x8x8x32xf32>,
      %c0_86 = arith.constant 0 : index
      %c1_87 = arith.constant 1 : index
      %c0_88 = arith.constant 0 : index
      %c0_89 = arith.constant 0 : index
      %180 = vector.load %arg6[%c0_86, %c1_87, %c0_88, %c0_89] : memref<1x2x8x8xf32, #tpu.memory_space<vmem>>, vector<1x1x8x8xf32>
      %181 = vector.shape_cast %180 : vector<1x1x8x8xf32> to vector<8x8xf32>
      %cst_90 = arith.constant 0.000000e+00 : f32
      %182 = vector.broadcast %cst_90 : f32 to vector<8x8xf32>
      %183 = arith.cmpf ogt, %181, %182 : vector<8x8xf32>
      %184 = arith.ori %183, %161 : vector<8x8xi1>
      %cst_91 = arith.constant 0.000000e+00 : f32
      %cst_92 = arith.constant -1.000000e+09 : f32
      %185 = vector.broadcast %cst_91 : f32 to vector<8x8xf32>
      %186 = vector.broadcast %cst_92 : f32 to vector<8x8xf32>
      %187 = arith.select %184, %185, %186 : vector<8x8xi1>, vector<8x8xf32>
      %188 = vector.shape_cast %181 : vector<8x8xf32> to vector<8x8x1xf32>
      %189 = vector.broadcast %188 : vector<8x8x1xf32> to vector<8x8x32xf32>
      %190 = vector.broadcast %158 : vector<1x1x32xf32> to vector<8x8x32xf32>
      %191 = arith.mulf %189, %190 : vector<8x8x32xf32>
      %192 = vector.shape_cast %187 : vector<8x8xf32> to vector<8x8x1xf32>
      %193 = vector.broadcast %192 : vector<8x8x1xf32> to vector<8x8x32xf32>
      %194 = arith.addf %191, %193 : vector<8x8x32xf32>
      %c1_93 = arith.constant 1 : index
      %c0_94 = arith.constant 0 : index
      %c0_95 = arith.constant 0 : index
      %c0_96 = arith.constant 0 : index
      %195 = vector.load %arg14[%c1_93, %c0_94, %c0_95, %c0_96] : memref<2x8x8x32xf32, #tpu.memory_space<vmem>>, vector<1x8x8x32xf32>
      %196 = vector.shape_cast %195 : vector<1x8x8x32xf32> to vector<8x8x32xf32>
      %197 = vector.shape_cast %194 : vector<8x8x32xf32> to vector<1x8x8x32xf32>
      tpu.vector_store %arg14[%c1_93, %c0_94, %c0_95, %c0_96], %197 {strides = array<i32>} : memref<2x8x8x32xf32, #tpu.memory_space<vmem>>, vector<1x8x8x32xf32>,
    } else {
    }
    %c0 = arith.constant 0 : index
    %c0_1 = arith.constant 0 : index
    %c0_2 = arith.constant 0 : index
    %3 = vector.load %arg4[%c0, %c0_1, %c0_2] : memref<1x16x1xf32, #tpu.memory_space<vmem>>, vector<1x16x1xf32>
    %4 = vector.shape_cast %3 : vector<1x16x1xf32> to vector<16x1xf32>
    %c0_3 = arith.constant 0 : index
    %5 = arith.index_cast %arg1 : i32 to index
    %c0_4 = arith.constant 0 : index
    %c0_5 = arith.constant 0 : index
    %6 = vector.load %arg5[%c0_3, %5, %c0_4, %c0_5] : memref<1x3x16x1xf32, #tpu.memory_space<vmem>>, vector<1x1x16x1xf32>
    %7 = vector.shape_cast %6 : vector<1x1x16x1xf32> to vector<1x16x1xf32>
    %8 = vector.shape_cast %7 : vector<1x16x1xf32> to vector<16x1xf32>
    %c0_6 = arith.constant 0 : index
    %c0_7 = arith.constant 0 : index
    %9 = vector.load %arg7[%c0_6, %c0_7] : memref<8x32xf32, #tpu.memory_space<vmem>>, vector<1x32xf32>
    %c1 = arith.constant 1 : index
    %c0_8 = arith.constant 0 : index
    %10 = vector.load %arg7[%c1, %c0_8] : memref<8x32xf32, #tpu.memory_space<vmem>>, vector<1x32xf32>
    %c2 = arith.constant 2 : index
    %c0_9 = arith.constant 0 : index
    %11 = vector.load %arg7[%c2, %c0_9] : memref<8x32xf32, #tpu.memory_space<vmem>>, vector<1x32xf32>
    %c3 = arith.constant 3 : index
    %c0_10 = arith.constant 0 : index
    %12 = vector.load %arg7[%c3, %c0_10] : memref<8x32xf32, #tpu.memory_space<vmem>>, vector<1x32xf32>
    %c4 = arith.constant 4 : index
    %c0_11 = arith.constant 0 : index
    %13 = vector.load %arg7[%c4, %c0_11] : memref<8x32xf32, #tpu.memory_space<vmem>>, vector<1x32xf32>
    %c5 = arith.constant 5 : index
    %c0_12 = arith.constant 0 : index
    %14 = vector.load %arg7[%c5, %c0_12] : memref<8x32xf32, #tpu.memory_space<vmem>>, vector<1x32xf32>
    %c0_13 = arith.constant 0 : index
    %c0_14 = arith.constant 0 : index
    %15 = vector.load %arg12[%c0_13, %c0_14] : memref<16x32xf32, #tpu.memory_space<vmem>>, vector<16x32xf32>
    %16 = arith.truncf %15 : vector<16x32xf32> to vector<16x32xbf16>
    %c0_15 = arith.constant 0 : index
    %c0_16 = arith.constant 0 : index
    %17 = vector.load %arg8[%c0_15, %c0_16] : memref<32x98xbf16, #tpu.memory_space<vmem>>, vector<32x98xbf16>
    %cst = arith.constant dense<0.000000e+00> : vector<16x98xf32>
    %18 = tpu.matmul %16, %17, %cst {dimension_numbers = #tpu.dot_dimension_numbers<[1], [0], [0], [1], [0, 0, 1, 1], [], []>} : vector<16x32xbf16>, vector<32x98xbf16>, vector<16x98xf32> -> vector<16x98xf32>
    %19 = vector.broadcast %4 : vector<16x1xf32> to vector<16x32xf32>
    %20 = vector.broadcast %9 : vector<1x32xf32> to vector<16x32xf32>
    %21 = arith.mulf %19, %20 : vector<16x32xf32>
    %22 = vector.broadcast %8 : vector<16x1xf32> to vector<16x32xf32>
    %23 = vector.broadcast %10 : vector<1x32xf32> to vector<16x32xf32>
    %24 = arith.mulf %22, %23 : vector<16x32xf32>
    %25 = arith.addf %21, %24 : vector<16x32xf32>
    %26 = vector.extract_strided_slice %18 {offsets = [0, 0], sizes = [16, 32], strides = [1, 1]} : vector<16x98xf32> to vector<16x32xf32>
    %27 = arith.addf %25, %26 : vector<16x32xf32>
    %28 = vector.broadcast %4 : vector<16x1xf32> to vector<16x32xf32>
    %29 = vector.broadcast %11 : vector<1x32xf32> to vector<16x32xf32>
    %30 = arith.mulf %28, %29 : vector<16x32xf32>
    %31 = vector.broadcast %8 : vector<16x1xf32> to vector<16x32xf32>
    %32 = vector.broadcast %12 : vector<1x32xf32> to vector<16x32xf32>
    %33 = arith.mulf %31, %32 : vector<16x32xf32>
    %34 = arith.addf %30, %33 : vector<16x32xf32>
    %35 = vector.extract_strided_slice %18 {offsets = [0, 32], sizes = [16, 32], strides = [1, 1]} : vector<16x98xf32> to vector<16x32xf32>
    %36 = arith.addf %34, %35 : vector<16x32xf32>
    %37 = vector.broadcast %4 : vector<16x1xf32> to vector<16x32xf32>
    %38 = vector.broadcast %13 : vector<1x32xf32> to vector<16x32xf32>
    %39 = arith.mulf %37, %38 : vector<16x32xf32>
    %40 = vector.broadcast %8 : vector<16x1xf32> to vector<16x32xf32>
    %41 = vector.broadcast %14 : vector<1x32xf32> to vector<16x32xf32>
    %42 = arith.mulf %40, %41 : vector<16x32xf32>
    %43 = arith.addf %39, %42 : vector<16x32xf32>
    %44 = vector.extract_strided_slice %18 {offsets = [0, 64], sizes = [16, 32], strides = [1, 1]} : vector<16x98xf32> to vector<16x32xf32>
    %45 = arith.addf %43, %44 : vector<16x32xf32>
    %46 = vector.extract_strided_slice %18 {offsets = [0, 96], sizes = [16, 2], strides = [1, 1]} : vector<16x98xf32> to vector<16x2xf32>
    %47 = vector.extract_strided_slice %36 {offsets = [0, 0], sizes = [8, 32], strides = [1, 1]} : vector<16x32xf32> to vector<8x32xf32>
    %48 = vector.shape_cast %47 : vector<8x32xf32> to vector<8x1x32xf32>
    %c0_17 = arith.constant 0 : index
    %c0_18 = arith.constant 0 : index
    %c0_19 = arith.constant 0 : index
    %c0_20 = arith.constant 0 : index
    %49 = vector.load %arg14[%c0_17, %c0_18, %c0_19, %c0_20] : memref<2x8x8x32xf32, #tpu.memory_space<vmem>>, vector<1x8x8x32xf32>
    %50 = vector.shape_cast %49 : vector<1x8x8x32xf32> to vector<8x8x32xf32>
    %51 = vector.broadcast %48 : vector<8x1x32xf32> to vector<8x8x32xf32>
    %52 = arith.addf %51, %50 : vector<8x8x32xf32>
    %cst_21 = arith.constant dense<0xFF800000> : vector<8x32xf32>
    %53 = vector.multi_reduction <maximumf>, %52, %cst_21 [0] : vector<8x8x32xf32> to vector<8x32xf32>
    %54 = vector.extract_strided_slice %36 {offsets = [8, 0], sizes = [8, 32], strides = [1, 1]} : vector<16x32xf32> to vector<8x32xf32>
    %55 = vector.shape_cast %54 : vector<8x32xf32> to vector<8x1x32xf32>
    %c1_22 = arith.constant 1 : index
    %c0_23 = arith.constant 0 : index
    %c0_24 = arith.constant 0 : index
    %c0_25 = arith.constant 0 : index
    %56 = vector.load %arg14[%c1_22, %c0_23, %c0_24, %c0_25] : memref<2x8x8x32xf32, #tpu.memory_space<vmem>>, vector<1x8x8x32xf32>
    %57 = vector.shape_cast %56 : vector<1x8x8x32xf32> to vector<8x8x32xf32>
    %58 = vector.broadcast %55 : vector<8x1x32xf32> to vector<8x8x32xf32>
    %59 = arith.addf %58, %57 : vector<8x8x32xf32>
    %cst_26 = arith.constant dense<0xFF800000> : vector<8x32xf32>
    %60 = vector.multi_reduction <maximumf>, %59, %cst_26 [0] : vector<8x8x32xf32> to vector<8x32xf32>
    %61 = tpu.concatenate %53, %60 in 0 : vector<8x32xf32>, vector<8x32xf32> -> vector<16x32xf32>
    %62 = arith.addf %27, %61 : vector<16x32xf32>
    %63 = arith.truncf %62 : vector<16x32xf32> to vector<16x32xbf16>
    %c0_27 = arith.constant 0 : index
    %c0_28 = arith.constant 0 : index
    %64 = vector.load %arg9[%c0_27, %c0_28] : memref<32x32xbf16, #tpu.memory_space<vmem>>, vector<32x32xbf16>
    %cst_29 = arith.constant dense<0.000000e+00> : vector<16x32xf32>
    %65 = tpu.matmul %63, %64, %cst_29 {dimension_numbers = #tpu.dot_dimension_numbers<[1], [0], [0], [1], [0, 0, 1, 1], [], []>} : vector<16x32xbf16>, vector<32x32xbf16>, vector<16x32xf32> -> vector<16x32xf32>
    %66 = arith.addf %45, %65 : vector<16x32xf32>
    %cst_30 = arith.constant 0.000000e+00 : f32
    %67 = vector.broadcast %cst_30 : f32 to vector<16x32xf32>
    %68 = arith.maximumf %66, %67 : vector<16x32xf32>
    %69 = arith.truncf %68 : vector<16x32xf32> to vector<16x32xbf16>
    %c0_31 = arith.constant 0 : index
    %c0_32 = arith.constant 0 : index
    %70 = vector.load %arg10[%c0_31, %c0_32] : memref<32x2xbf16, #tpu.memory_space<vmem>>, vector<32x2xbf16>
    %cst_33 = arith.constant dense<0.000000e+00> : vector<16x2xf32>
    %71 = tpu.matmul %69, %70, %cst_33 {dimension_numbers = #tpu.dot_dimension_numbers<[1], [0], [0], [1], [0, 0, 1, 1], [], []>} : vector<16x32xbf16>, vector<32x2xbf16>, vector<16x2xf32> -> vector<16x2xf32>
    %c0_34 = arith.constant 0 : index
    %72 = memref.load %arg3[%c0_34] : memref<4xf32, #tpu.memory_space<smem>>
    %73 = vector.broadcast %72 : f32 to vector<16x1xf32>
    %74 = arith.mulf %73, %4 : vector<16x1xf32>
    %c1_35 = arith.constant 1 : index
    %75 = memref.load %arg3[%c1_35] : memref<4xf32, #tpu.memory_space<smem>>
    %76 = vector.broadcast %75 : f32 to vector<16x1xf32>
    %77 = arith.mulf %76, %8 : vector<16x1xf32>
    %78 = arith.addf %74, %77 : vector<16x1xf32>
    %79 = vector.extract_strided_slice %46 {offsets = [0, 0], sizes = [16, 1], strides = [1, 1]} : vector<16x2xf32> to vector<16x1xf32>
    %80 = arith.addf %78, %79 : vector<16x1xf32>
    %81 = vector.extract_strided_slice %71 {offsets = [0, 0], sizes = [16, 1], strides = [1, 1]} : vector<16x2xf32> to vector<16x1xf32>
    %82 = arith.addf %80, %81 : vector<16x1xf32>
    %c2_36 = arith.constant 2 : index
    %83 = memref.load %arg3[%c2_36] : memref<4xf32, #tpu.memory_space<smem>>
    %84 = vector.broadcast %83 : f32 to vector<16x1xf32>
    %85 = arith.mulf %84, %4 : vector<16x1xf32>
    %c3_37 = arith.constant 3 : index
    %86 = memref.load %arg3[%c3_37] : memref<4xf32, #tpu.memory_space<smem>>
    %87 = vector.broadcast %86 : f32 to vector<16x1xf32>
    %88 = arith.mulf %87, %8 : vector<16x1xf32>
    %89 = arith.addf %85, %88 : vector<16x1xf32>
    %90 = vector.extract_strided_slice %46 {offsets = [0, 1], sizes = [16, 1], strides = [1, 1]} : vector<16x2xf32> to vector<16x1xf32>
    %91 = arith.addf %89, %90 : vector<16x1xf32>
    %92 = vector.extract_strided_slice %71 {offsets = [0, 1], sizes = [16, 1], strides = [1, 1]} : vector<16x2xf32> to vector<16x1xf32>
    %93 = arith.addf %91, %92 : vector<16x1xf32>
    %c1_i32 = arith.constant 1 : i32
    %94 = arith.addi %arg1, %c1_i32 : i32
    %95 = arith.sitofp %94 : i32 to f32
    %c0_i32_38 = arith.constant 0 : i32
    %96 = arith.cmpi eq, %arg1, %c0_i32_38 : i32
    %c2_i32 = arith.constant 2 : i32
    %97 = arith.muli %arg0, %c2_i32 : i32
    %c0_i32_39 = arith.constant 0 : i32
    %98 = arith.addi %97, %c0_i32_39 : i32
    %99 = arith.index_cast %98 : i32 to index
    %100 = memref.load %arg2[%99] : memref<4xf32, #tpu.memory_space<smem>>
    %101 = arith.cmpf ogt, %100, %95 : f32
    %102 = arith.extui %101 : i1 to i32
    %103 = arith.sitofp %102 : i32 to f32
    %cst_40 = arith.constant 1.000000e+00 : f32
    %104 = arith.select %96, %cst_40, %103 : f32
    %105 = vector.extract_strided_slice %82 {offsets = [0, 0], sizes = [8, 1], strides = [1, 1]} : vector<16x1xf32> to vector<8x1xf32>
    %106 = vector.broadcast %104 : f32 to vector<8x1xf32>
    %107 = arith.mulf %106, %105 : vector<8x1xf32>
    %cst_41 = arith.constant 1.000000e+00 : f32
    %108 = arith.subf %cst_41, %104 : f32
    %c0_42 = arith.constant 0 : index
    %c0_43 = arith.constant 0 : index
    %109 = vector.load %arg13[%c0_42, %c0_43] : memref<16x1xf32, #tpu.memory_space<vmem>>, vector<8x1xf32>
    %110 = vector.broadcast %108 : f32 to vector<8x1xf32>
    %111 = arith.mulf %110, %109 : vector<8x1xf32>
    %112 = arith.addf %107, %111 : vector<8x1xf32>
    %c0_44 = arith.constant 0 : index
    %c0_45 = arith.constant 0 : index
    %113 = vector.load %arg13[%c0_44, %c0_45] : memref<16x1xf32, #tpu.memory_space<vmem>>, vector<8x1xf32>
    tpu.vector_store %arg13[%c0_44, %c0_45], %112 {strides = array<i32>} : memref<16x1xf32, #tpu.memory_space<vmem>>, vector<8x1xf32>,
    %c0_i32_46 = arith.constant 0 : i32
    %114 = arith.cmpi eq, %arg1, %c0_i32_46 : i32
    %c2_i32_47 = arith.constant 2 : i32
    %115 = arith.muli %arg0, %c2_i32_47 : i32
    %c1_i32_48 = arith.constant 1 : i32
    %116 = arith.addi %115, %c1_i32_48 : i32
    %117 = arith.index_cast %116 : i32 to index
    %118 = memref.load %arg2[%117] : memref<4xf32, #tpu.memory_space<smem>>
    %119 = arith.cmpf ogt, %118, %95 : f32
    %120 = arith.extui %119 : i1 to i32
    %121 = arith.sitofp %120 : i32 to f32
    %cst_49 = arith.constant 1.000000e+00 : f32
    %122 = arith.select %114, %cst_49, %121 : f32
    %123 = vector.extract_strided_slice %82 {offsets = [8, 0], sizes = [8, 1], strides = [1, 1]} : vector<16x1xf32> to vector<8x1xf32>
    %124 = vector.broadcast %122 : f32 to vector<8x1xf32>
    %125 = arith.mulf %124, %123 : vector<8x1xf32>
    %cst_50 = arith.constant 1.000000e+00 : f32
    %126 = arith.subf %cst_50, %122 : f32
    %c8 = arith.constant 8 : index
    %c0_51 = arith.constant 0 : index
    %127 = vector.load %arg13[%c8, %c0_51] : memref<16x1xf32, #tpu.memory_space<vmem>>, vector<8x1xf32>
    %128 = vector.broadcast %126 : f32 to vector<8x1xf32>
    %129 = arith.mulf %128, %127 : vector<8x1xf32>
    %130 = arith.addf %125, %129 : vector<8x1xf32>
    %c8_52 = arith.constant 8 : index
    %c0_53 = arith.constant 0 : index
    %131 = vector.load %arg13[%c8_52, %c0_53] : memref<16x1xf32, #tpu.memory_space<vmem>>, vector<8x1xf32>
    tpu.vector_store %arg13[%c8_52, %c0_53], %130 {strides = array<i32>} : memref<16x1xf32, #tpu.memory_space<vmem>>, vector<8x1xf32>,
    %c0_54 = arith.constant 0 : index
    %c0_55 = arith.constant 0 : index
    %132 = vector.load %arg12[%c0_54, %c0_55] : memref<16x32xf32, #tpu.memory_space<vmem>>, vector<16x32xf32>
    tpu.vector_store %arg12[%c0_54, %c0_55], %68 {strides = array<i32>} : memref<16x32xf32, #tpu.memory_space<vmem>>, vector<16x32xf32>,
    %133 = tpu.iota {dimensions = array<i32: 1>} : vector<16x128xi32>
    %c0_56 = arith.constant 0 : index
    %c0_57 = arith.constant 0 : index
    %c0_58 = arith.constant 0 : index
    %134 = vector.load %arg11[%c0_56, %c0_57, %c0_58] : memref<1x16x128xf32, #tpu.memory_space<vmem>>, vector<1x16x128xf32>
    %135 = vector.shape_cast %134 : vector<1x16x128xf32> to vector<16x128xf32>
    %136 = vector.broadcast %arg1 : i32 to vector<16x128xi32>
    %137 = arith.cmpi eq, %133, %136 : vector<16x128xi32>
    %138 = vector.shape_cast %93 : vector<16x1xf32> to vector<16x1xf32>
    %139 = vector.broadcast %138 : vector<16x1xf32> to vector<16x128xf32>
    %140 = arith.select %137, %139, %135 : vector<16x128xi1>, vector<16x128xf32>
    %c3_i32 = arith.constant 3 : i32
    %141 = arith.addi %c3_i32, %arg1 : i32
    %142 = vector.broadcast %141 : i32 to vector<16x128xi32>
    %143 = arith.cmpi eq, %133, %142 : vector<16x128xi32>
    %c0_59 = arith.constant 0 : index
    %c0_60 = arith.constant 0 : index
    %144 = vector.load %arg13[%c0_59, %c0_60] : memref<16x1xf32, #tpu.memory_space<vmem>>, vector<16x1xf32>
    %145 = vector.shape_cast %144 : vector<16x1xf32> to vector<16x1xf32>
    %146 = vector.broadcast %145 : vector<16x1xf32> to vector<16x128xf32>
    %147 = arith.select %143, %146, %140 : vector<16x128xi1>, vector<16x128xf32>
    %c0_61 = arith.constant 0 : index
    %c0_62 = arith.constant 0 : index
    %c0_63 = arith.constant 0 : index
    %148 = vector.load %arg11[%c0_61, %c0_62, %c0_63] : memref<1x16x128xf32, #tpu.memory_space<vmem>>, vector<1x16x128xf32>
    %149 = vector.shape_cast %148 : vector<1x16x128xf32> to vector<16x128xf32>
    %150 = vector.shape_cast %147 : vector<16x128xf32> to vector<1x16x128xf32>
    tpu.vector_store %arg11[%c0_61, %c0_62, %c0_63], %150 {strides = array<i32>} : memref<1x16x128xf32, #tpu.memory_space<vmem>>, vector<1x16x128xf32>,
    return
  }
  func.func @transform_0(%arg0: i32, %arg1: i32, %arg2: memref<4xf32, #tpu.memory_space<smem>>, %arg3: memref<4xf32, #tpu.memory_space<smem>>) -> (i32, i32, i32) {
    %c0_i32 = arith.constant 0 : i32
    %c0_i32_0 = arith.constant 0 : i32
    %c0_i32_1 = arith.constant 0 : i32
    return %arg0, %c0_i32, %c0_i32_0 : i32, i32, i32
  }
  func.func @transform_1(%arg0: i32, %arg1: i32, %arg2: memref<4xf32, #tpu.memory_space<smem>>, %arg3: memref<4xf32, #tpu.memory_space<smem>>) -> (i32, i32, i32, i32) {
    %c0_i32 = arith.constant 0 : i32
    %c0_i32_0 = arith.constant 0 : i32
    %c0_i32_1 = arith.constant 0 : i32
    %c0_i32_2 = arith.constant 0 : i32
    return %arg0, %c0_i32, %c0_i32_0, %c0_i32_1 : i32, i32, i32, i32
  }
  func.func @transform_2(%arg0: i32, %arg1: i32, %arg2: memref<4xf32, #tpu.memory_space<smem>>, %arg3: memref<4xf32, #tpu.memory_space<smem>>) -> (i32, i32, i32, i32) {
    %c0_i32 = arith.constant 0 : i32
    %c0_i32_0 = arith.constant 0 : i32
    %c0_i32_1 = arith.constant 0 : i32
    %c0_i32_2 = arith.constant 0 : i32
    return %arg0, %c0_i32, %c0_i32_0, %c0_i32_1 : i32, i32, i32, i32
  }
  func.func @transform_3(%arg0: i32, %arg1: i32, %arg2: memref<4xf32, #tpu.memory_space<smem>>, %arg3: memref<4xf32, #tpu.memory_space<smem>>) -> (i32, i32) {
    %c0_i32 = arith.constant 0 : i32
    %c0_i32_0 = arith.constant 0 : i32
    %c0_i32_1 = arith.constant 0 : i32
    return %c0_i32, %c0_i32_0 : i32, i32
  }
  func.func @transform_4(%arg0: i32, %arg1: i32, %arg2: memref<4xf32, #tpu.memory_space<smem>>, %arg3: memref<4xf32, #tpu.memory_space<smem>>) -> (i32, i32) {
    %c0_i32 = arith.constant 0 : i32
    %c0_i32_0 = arith.constant 0 : i32
    %c0_i32_1 = arith.constant 0 : i32
    return %c0_i32, %c0_i32_0 : i32, i32
  }
  func.func @transform_5(%arg0: i32, %arg1: i32, %arg2: memref<4xf32, #tpu.memory_space<smem>>, %arg3: memref<4xf32, #tpu.memory_space<smem>>) -> (i32, i32) {
    %c0_i32 = arith.constant 0 : i32
    %c0_i32_0 = arith.constant 0 : i32
    %c0_i32_1 = arith.constant 0 : i32
    return %c0_i32, %c0_i32_0 : i32, i32
  }
  func.func @transform_6(%arg0: i32, %arg1: i32, %arg2: memref<4xf32, #tpu.memory_space<smem>>, %arg3: memref<4xf32, #tpu.memory_space<smem>>) -> (i32, i32) {
    %c0_i32 = arith.constant 0 : i32
    %c0_i32_0 = arith.constant 0 : i32
    %c0_i32_1 = arith.constant 0 : i32
    return %c0_i32, %c0_i32_0 : i32, i32
  }
  func.func @transform_7(%arg0: i32, %arg1: i32, %arg2: memref<4xf32, #tpu.memory_space<smem>>, %arg3: memref<4xf32, #tpu.memory_space<smem>>) -> (i32, i32, i32) {
    %c0_i32 = arith.constant 0 : i32
    %c0_i32_0 = arith.constant 0 : i32
    %c0_i32_1 = arith.constant 0 : i32
    return %arg0, %c0_i32, %c0_i32_0 : i32, i32, i32
  }
}

</mosaic_0001>

<llo_original>
// kernel: tpu_custom_call.1
$region0: #{tpu_custom_call.1}
  #allocation0 [shape = 'u32[]', space=smem, size = 0x4, offset = 0x4, fixed_abs, tag = 'smem constant byte address 0x4 - core index']
  #allocation1 [shape = 'u32[72,128]{1,0:T(1,128)}', space=vmem, size = 0x9000, scoped, tag = 'internal scratch']
  #allocation2 [shape = 'f32[16,32]{1,0:T(8,128)}', space=vmem, size = 0x2000, scoped, tag = 'scratch operand']
  #allocation3 [shape = 'f32[16,1]{1,0:T(8,128)}', space=vmem, size = 0x2000, scoped, tag = 'scratch operand']
  #allocation4 [shape = 'f32[2,8,8,32]{3,2,1,0:T(8,128)}', space=vmem, size = 0x10000, scoped, tag = 'scratch operand']
  #allocation5 [shape = 's32[1]{0}', space=sflag, size = 0x4, scoped, tag = 'scoped memory for tpu_custom_call.1']
  #allocation6 [shape = 'u8[512]{0}', space=smem, size = 0x200, scoped, tag = 'prefetched SMEM operand 0']
  #allocation7 [shape = 'u8[512]{0}', space=smem, size = 0x200, scoped, tag = 'prefetched SMEM operand 1']
  %s0 = inlined_call_operand.vmem [shape: f32[4], index: 0, kind: input, shape index: {}]
  %s1 = inlined_call_operand.vmem [shape: f32[4], index: 1, kind: input, shape index: {}]
  %s2 = inlined_call_operand.vmem [shape: f32[2,16,1], index: 2, kind: input, shape index: {}]
  %s3 = inlined_call_operand.vmem [shape: f32[2,3,16,1], index: 3, kind: input, shape index: {}]
  %s4 = inlined_call_operand.vmem [shape: f32[2,2,8,8], index: 4, kind: input, shape index: {}]
  %s5 = inlined_call_operand.vmem [shape: f32[8,32], index: 5, kind: input, shape index: {}]
  %s6 = inlined_call_operand.vmem [shape: bf16[32,98], index: 6, kind: input, shape index: {}]
  %s7 = inlined_call_operand.vmem [shape: bf16[32,32], index: 7, kind: input, shape index: {}]
  %s8 = inlined_call_operand.vmem [shape: bf16[32,2], index: 8, kind: input, shape index: {}]
  %s9 = inlined_call_operand.hbm [shape: f32[2,16,128], index: 9, kind: output, shape index: {}]
  %s10 = sld [smem:[#allocation0]]
  $region65: #{tpu_custom_call.1} parent=0
    _
  %s12 = ssub.s32 1, %s10
  %s13 = scalar_select 0, %s12, %s10
  %s15 = sshll.u32 %s0, 4
  %s16 = int_to_ptr.vmem [resolvable:$true] %s15
  %18 = dma.vmem_to_smem %s16, 16, [#allocation6], [#allocation5]
  %s20 = sshll.u32 %s1, 4
  %s21 = int_to_ptr.vmem [resolvable:$true] %s20
  %23 = dma.vmem_to_smem %s21, 16, [#allocation7], [#allocation5]
  %25 = dma.done [#allocation5], 32
  %26 = sfence
  $region1: #{tpu_custom_call.1} parent=0
    #allocation8 [shape = 'u8[16384]{0}', space=vmem, size = 0x4000, scoped, tag = 'output window, operand 0']
    #allocation9 [shape = 's32[2]{0}', space=sflag, size = 0x8, scoped, tag = 'scoped memory for tpu_custom_call.1']
    %27 = vsyncpa [#allocation9], 0
    %s28 = scalar_lea.sflag [#allocation9], 1
    %29 = vsyncpa %s28, 0
    loop: start=0, step=1, limit=8
    $region2: #{tpu_custom_call.1} parent=1 // loop_pre_header
      _
    $region3: #{tpu_custom_call.1} parent=1 // loop_header
      %s31 = sphi 0, %s35
      %p32 = scmp.ge.s32.totalorder %s31, 8
      %s38 = sphi 0, %s50
      %s39 = sphi 0, %s46
      %s40 = sphi 0, %s38
      %s41 = sphi 0, %s39
      %s42 = sphi 0, %s40
      %s43 = sphi 0, %s41
      %s53 = sphi 0, %s55
      %s56 = sphi 0, %s53
      %s57 = sphi 0, %s56
      %s73 = sphi 0, %s57
      %s79 = sphi 0, %s81
      %s82 = sphi 0, %s79
      %s83 = sphi 0, %s82
      %s99 = sphi 0, %s83
      %s105 = sphi 0, %s107
      %s108 = sphi 0, %s105
      %s109 = sphi 0, %s108
      %s125 = sphi 0, %s109
      %s129 = sphi 0, %s129
      %s131 = sphi 0, %s129
      %s132 = sphi 0, %s131
      %s146 = sphi 0, %s132
      %s150 = sphi 0, %s150
      %s152 = sphi 0, %s150
      %s153 = sphi 0, %s152
      %s167 = sphi 0, %s153
      %s171 = sphi 0, %s171
      %s173 = sphi 0, %s171
      %s174 = sphi 0, %s173
      %s188 = sphi 0, %s174
      %s192 = sphi 0, %s192
      %s194 = sphi 0, %s192
      %s195 = sphi 0, %s194
      %s209 = sphi 0, %s195
      %s215 = sphi 0, %s217
      %s218 = sphi 0, %s215
      %s219 = sphi 0, %s218
      %s235 = sphi 0, %s219
    $region4: #{tpu_custom_call.1} parent=1 // loop_header_branch
      %34 = sbr.rel (%p32) target = $region8
    $region5: #{tpu_custom_call.1} parent=1 // loop_body
      %s36 = ssub.s32 %s31, 1
      %s37 = ssub.s32 %s31, 2
      %s44 = sadd.s32 1, %s39
      %p45 = scmp.ge.s32.totalorder %s44, 3
      %s46 = scalar_select %p45, 0, %s44
      %s47 = sadd.s32 1, %s38
      %s48 = scalar_select %p45, %s47, %s38
      %p49 = scmp.ge.s32.totalorder %s48, 2
      %s50 = scalar_select %p49, 0, %s48
      %s51 = ssub.s32 %s38, %s50
      %p52 = scmp.eq.s32.totalorder %s51, 0
      %s54 = sadd.s32 %s53, 1
      %s55 = scalar_select %p52, %s53, %s54
      %p58 = pneg %p52
      %p59 = scmp.eq.s32.totalorder %s31, 5
      %p60 = por %p58, %p59
      %p61 = scmp.ne.s32.totalorder %s53, %s56
      %p62 = scmp.eq.s32.totalorder %s31, 0
      %p63 = por %p61, %p62
      %p64 = scmp.ne.s32.totalorder %s53, %s56
      %p65 = scmp.eq.s32.totalorder %s36, 5
      %p66 = por %p64, %p65
      %p67 = scmp.ne.s32.totalorder %s56, %s57
      %p68 = scmp.eq.s32.totalorder %s36, 0
      %p69 = por %p67, %p68
      %p70 = scmp.ne.s32.totalorder %s56, %s57
      %p71 = scmp.eq.s32.totalorder %s37, 5
      %p72 = por %p70, %p71
      %p74 = scmp.ne.s32.totalorder %s57, %s73
      %p75 = scmp.eq.s32.totalorder %s37, 0
      %p76 = por %p74, %p75
      %s77 = ssub.s32 %s38, %s50
      %p78 = scmp.eq.s32.totalorder %s77, 0
      %s80 = sadd.s32 %s79, 1
      %s81 = scalar_select %p78, %s79, %s80
      %p84 = pneg %p78
      %p85 = scmp.eq.s32.totalorder %s31, 5
      %p86 = por %p84, %p85
      %p87 = scmp.ne.s32.totalorder %s79, %s82
      %p88 = scmp.eq.s32.totalorder %s31, 0
      %p89 = por %p87, %p88
      %p90 = scmp.ne.s32.totalorder %s79, %s82
      %p91 = scmp.eq.s32.totalorder %s36, 5
      %p92 = por %p90, %p91
      %p93 = scmp.ne.s32.totalorder %s82, %s83
      %p94 = scmp.eq.s32.totalorder %s36, 0
      %p95 = por %p93, %p94
      %p96 = scmp.ne.s32.totalorder %s82, %s83
      %p97 = scmp.eq.s32.totalorder %s37, 5
      %p98 = por %p96, %p97
      %p100 = scmp.ne.s32.totalorder %s83, %s99
      %p101 = scmp.eq.s32.totalorder %s37, 0
      %p102 = por %p100, %p101
      %s103 = ssub.s32 %s38, %s50
      %p104 = scmp.eq.s32.totalorder %s103, 0
      %s106 = sadd.s32 %s105, 1
      %s107 = scalar_select %p104, %s105, %s106
      %p110 = pneg %p104
      %p111 = scmp.eq.s32.totalorder %s31, 5
      %p112 = por %p110, %p111
      %p113 = scmp.ne.s32.totalorder %s105, %s108
      %p114 = scmp.eq.s32.totalorder %s31, 0
      %p115 = por %p113, %p114
      %p116 = scmp.ne.s32.totalorder %s105, %s108
      %p117 = scmp.eq.s32.totalorder %s36, 5
      %p118 = por %p116, %p117
      %p119 = scmp.ne.s32.totalorder %s108, %s109
      %p120 = scmp.eq.s32.totalorder %s36, 0
      %p121 = por %p119, %p120
      %p122 = scmp.ne.s32.totalorder %s108, %s109
      %p123 = scmp.eq.s32.totalorder %s37, 5
      %p124 = por %p122, %p123
      %p126 = scmp.ne.s32.totalorder %s109, %s125
      %p127 = scmp.eq.s32.totalorder %s37, 0
      %p128 = por %p126, %p127
      %s130 = sadd.s32 %s129, 1
      %p133 = scmp.eq.s32.totalorder %s31, 5
      %p134 = scmp.ne.s32.totalorder %s129, %s131
      %p135 = scmp.eq.s32.totalorder %s31, 0
      %p136 = por %p134, %p135
      %p137 = scmp.ne.s32.totalorder %s129, %s131
      %p138 = scmp.eq.s32.totalorder %s36, 5
      %p139 = por %p137, %p138
      %p140 = scmp.ne.s32.totalorder %s131, %s132
      %p141 = scmp.eq.s32.totalorder %s36, 0
      %p142 = por %p140, %p141
      %p143 = scmp.ne.s32.totalorder %s131, %s132
      %p144 = scmp.eq.s32.totalorder %s37, 5
      %p145 = por %p143, %p144
      %p147 = scmp.ne.s32.totalorder %s132, %s146
      %p148 = scmp.eq.s32.totalorder %s37, 0
      %p149 = por %p147, %p148
      %s151 = sadd.s32 %s150, 1
      %p154 = scmp.eq.s32.totalorder %s31, 5
      %p155 = scmp.ne.s32.totalorder %s150, %s152
      %p156 = scmp.eq.s32.totalorder %s31, 0
      %p157 = por %p155, %p156
      %p158 = scmp.ne.s32.totalorder %s150, %s152
      %p159 = scmp.eq.s32.totalorder %s36, 5
      %p160 = por %p158, %p159
      %p161 = scmp.ne.s32.totalorder %s152, %s153
      %p162 = scmp.eq.s32.totalorder %s36, 0
      %p163 = por %p161, %p162
      %p164 = scmp.ne.s32.totalorder %s152, %s153
      %p165 = scmp.eq.s32.totalorder %s37, 5
      %p166 = por %p164, %p165
      %p168 = scmp.ne.s32.totalorder %s153, %s167
      %p169 = scmp.eq.s32.totalorder %s37, 0
      %p170 = por %p168, %p169
      %s172 = sadd.s32 %s171, 1
      %p175 = scmp.eq.s32.totalorder %s31, 5
      %p176 = scmp.ne.s32.totalorder %s171, %s173
      %p177 = scmp.eq.s32.totalorder %s31, 0
      %p178 = por %p176, %p177
      %p179 = scmp.ne.s32.totalorder %s171, %s173
      %p180 = scmp.eq.s32.totalorder %s36, 5
      %p181 = por %p179, %p180
      %p182 = scmp.ne.s32.totalorder %s173, %s174
      %p183 = scmp.eq.s32.totalorder %s36, 0
      %p184 = por %p182, %p183
      %p185 = scmp.ne.s32.totalorder %s173, %s174
      %p186 = scmp.eq.s32.totalorder %s37, 5
      %p187 = por %p185, %p186
      %p189 = scmp.ne.s32.totalorder %s174, %s188
      %p190 = scmp.eq.s32.totalorder %s37, 0
      %p191 = por %p189, %p190
      %s193 = sadd.s32 %s192, 1
      %p196 = scmp.eq.s32.totalorder %s31, 5
      %p197 = scmp.ne.s32.totalorder %s192, %s194
      %p198 = scmp.eq.s32.totalorder %s31, 0
      %p199 = por %p197, %p198
      %p200 = scmp.ne.s32.totalorder %s192, %s194
      %p201 = scmp.eq.s32.totalorder %s36, 5
      %p202 = por %p200, %p201
      %p203 = scmp.ne.s32.totalorder %s194, %s195
      %p204 = scmp.eq.s32.totalorder %s36, 0
      %p205 = por %p203, %p204
      %p206 = scmp.ne.s32.totalorder %s194, %s195
      %p207 = scmp.eq.s32.totalorder %s37, 5
      %p208 = por %p206, %p207
      %p210 = scmp.ne.s32.totalorder %s195, %s209
      %p211 = scmp.eq.s32.totalorder %s37, 0
      %p212 = por %p210, %p211
      %s213 = ssub.s32 %s38, %s50
      %p214 = scmp.eq.s32.totalorder %s213, 0
      %s216 = sadd.s32 %s215, 1
      %s217 = scalar_select %p214, %s215, %s216
      %p220 = pneg %p214
      %p221 = scmp.eq.s32.totalorder %s31, 5
      %p222 = por %p220, %p221
      %p223 = scmp.ne.s32.totalorder %s215, %s218
      %p224 = scmp.eq.s32.totalorder %s31, 0
      %p225 = por %p223, %p224
      %p226 = scmp.ne.s32.totalorder %s215, %s218
      %p227 = scmp.eq.s32.totalorder %s36, 5
      %p228 = por %p226, %p227
      %p229 = scmp.ne.s32.totalorder %s218, %s219
      %p230 = scmp.eq.s32.totalorder %s36, 0
      %p231 = por %p229, %p230
      %p232 = scmp.ne.s32.totalorder %s218, %s219
      %p233 = scmp.eq.s32.totalorder %s37, 5
      %p234 = por %p232, %p233
      %p236 = scmp.ne.s32.totalorder %s219, %s235
      %p237 = scmp.eq.s32.totalorder %s37, 0
      %p238 = por %p236, %p237
      %p239 = scmp.le.s32.totalorder 1, %s31
      %p240 = scmp.lt.s32.totalorder %s31, 7
      %p241 = pnand %p239, %p240
      %p242 = pneg %p241
      // Predicated region
      $region9: #{tpu_custom_call.1} parent=5 // pred_check
        _
      $region10: #{tpu_custom_call.1} parent=5 // pred_check_branch
        %244 = sbr.rel (%p241) target = $region12
      $region11: #{tpu_custom_call.1} parent=5 // pred_region
        %s245 = ssub.s32 %s31, 1
        // Predicated region
        $region13: #{tpu_custom_call.1} parent=11 // pred_check
          %p246 = pneg %p142
        $region14: #{tpu_custom_call.1} parent=11 // pred_check_branch
          %248 = sbr.rel (%p246) target = $region16
        $region15: #{tpu_custom_call.1} parent=11 // pred_region
          _
        $region16: #{tpu_custom_call.1} parent=11 // pred_fallthru
          _
        // Predicated region
        $region17: #{tpu_custom_call.1} parent=11 // pred_check
          %p249 = pneg %p163
        $region18: #{tpu_custom_call.1} parent=11 // pred_check_branch
          %251 = sbr.rel (%p249) target = $region20
        $region19: #{tpu_custom_call.1} parent=11 // pred_region
          _
        $region20: #{tpu_custom_call.1} parent=11 // pred_fallthru
          _
        // Predicated region
        $region21: #{tpu_custom_call.1} parent=11 // pred_check
          %p252 = pneg %p184
        $region22: #{tpu_custom_call.1} parent=11 // pred_check_branch
          %254 = sbr.rel (%p252) target = $region24
        $region23: #{tpu_custom_call.1} parent=11 // pred_region
          _
        $region24: #{tpu_custom_call.1} parent=11 // pred_fallthru
          _
        // Predicated region
        $region25: #{tpu_custom_call.1} parent=11 // pred_check
          %p255 = pneg %p205
        $region26: #{tpu_custom_call.1} parent=11 // pred_check_branch
          %257 = sbr.rel (%p255) target = $region28
        $region27: #{tpu_custom_call.1} parent=11 // pred_region
          _
        $region28: #{tpu_custom_call.1} parent=11 // pred_fallthru
          _
      $region12: #{tpu_custom_call.1} parent=5 // pred_fallthru
        _
      %p258 = scmp.lt.s32.totalorder %s31, 6
      // Predicated region
      $region29: #{tpu_custom_call.1} parent=5 // pred_check
        %p259 = pneg %p258
      $region30: #{tpu_custom_call.1} parent=5 // pred_check_branch
        %261 = sbr.rel (%p259) target = $region32
      $region31: #{tpu_custom_call.1} parent=5 // pred_region
        // Predicated region
        $region33: #{tpu_custom_call.1} parent=31 // pred_check
          %p262 = pneg %p63
        $region34: #{tpu_custom_call.1} parent=31 // pred_check_branch
          %264 = sbr.rel (%p262) target = $region36
        $region35: #{tpu_custom_call.1} parent=31 // pred_region
          %p265 = scmp.lt.s32.totalorder %s38, 1
          %s266 = scalar_select %p265, %s38, 1
          %s267 = smul.addr %s266, 2
          %s268 = smul.addr %s267, 8
          %s269 = scalar_lea.vmem %s2, %s268
        $region36: #{tpu_custom_call.1} parent=31 // pred_fallthru
          _
        // Predicated region
        $region37: #{tpu_custom_call.1} parent=31 // pred_check
          %p270 = pneg %p89
        $region38: #{tpu_custom_call.1} parent=31 // pred_check_branch
          %272 = sbr.rel (%p270) target = $region40
        $region39: #{tpu_custom_call.1} parent=31 // pred_region
          %p273 = scmp.lt.s32.totalorder %s38, 1
          %s274 = scalar_select %p273, %s38, 1
          %s275 = smul.addr %s274, 6
          %s276 = smul.addr %s275, 8
          %s277 = scalar_lea.vmem %s3, %s276
        $region40: #{tpu_custom_call.1} parent=31 // pred_fallthru
          _
        // Predicated region
        $region41: #{tpu_custom_call.1} parent=31 // pred_check
          %p278 = pneg %p115
        $region42: #{tpu_custom_call.1} parent=31 // pred_check_branch
          %280 = sbr.rel (%p278) target = $region44
        $region43: #{tpu_custom_call.1} parent=31 // pred_region
          %p281 = scmp.lt.s32.totalorder %s38, 1
          %s282 = scalar_select %p281, %s38, 1
          %s283 = smul.addr %s282, 2
          %s284 = smul.addr %s283, 8
          %s285 = scalar_lea.vmem %s4, %s284
        $region44: #{tpu_custom_call.1} parent=31 // pred_fallthru
          _
      $region32: #{tpu_custom_call.1} parent=5 // pred_fallthru
        _
      %p286 = scmp.le.s32.totalorder 1, %s31
      %p287 = scmp.lt.s32.totalorder %s31, 7
      %p288 = pnand %p286, %p287
      %p289 = pneg %p288
      // Predicated region
      $region45: #{tpu_custom_call.1} parent=5 // pred_check
        _
      $region46: #{tpu_custom_call.1} parent=5 // pred_check_branch
        %291 = sbr.rel (%p288) target = $region48
      $region47: #{tpu_custom_call.1} parent=5 // pred_region
        %s292 = ssub.s32 %s31, 1
        %p293 = scmp.lt.s32.totalorder %s40, 1
        %s294 = scalar_select %p293, %s40, 1
        %s295 = smul.addr %s294, 2
        %s296 = smul.addr %s295, 8
        %s297 = scalar_lea.vmem %s2, %s296
        %p298 = pneg %p69
        %p299 = pneg %p66
        %p300 = scmp.lt.s32.totalorder %s40, 1
        %s301 = scalar_select %p300, %s40, 1
        %s302 = smul.addr %s301, 6
        %s303 = smul.addr %s302, 8
        %s304 = scalar_lea.vmem %s3, %s303
        %p305 = pneg %p95
        %p306 = pneg %p92
        %p307 = scmp.lt.s32.totalorder %s40, 1
        %s308 = scalar_select %p307, %s40, 1
        %s309 = smul.addr %s308, 2
        %s310 = smul.addr %s309, 8
        %s311 = scalar_lea.vmem %s4, %s310
        %p312 = pneg %p121
        %p313 = pneg %p118
        %p314 = pneg %p142
        %p315 = pneg %p139
        %p316 = pneg %p163
        %p317 = pneg %p160
        %p318 = pneg %p184
        %p319 = pneg %p181
        %p320 = pneg %p205
        %p321 = pneg %p202
        %p322 = pneg %p231
        %p323 = pneg %p228
        %s324 = sand.u32 %s218, 1
        %s325 = scalar_lea.sflag [#allocation9], %s324
        %s326 = sand.u32 %s218, 1
        %s327 = smul.addr %s326, 16
        %s328 = scalar_lea.vmem [#allocation8], %s327
        %p329 = scmp.lt.s32.totalorder %s40, 1
        %s330 = scalar_select %p329, %s40, 1
        %s331 = smul.addr %s330, 2
        %s332 = smul.addr %s331, 8
        %s333 = scalar_lea.vmem %s2, %s332
        %p334 = scmp.lt.s32.totalorder %s40, 1
        %s335 = scalar_select %p334, %s40, 1
        %s336 = smul.addr %s335, 6
        %s337 = smul.addr %s336, 8
        %s338 = scalar_lea.vmem %s3, %s337
        %p339 = scmp.lt.s32.totalorder %s40, 1
        %s340 = scalar_select %p339, %s40, 1
        %s341 = smul.addr %s340, 2
        %s342 = smul.addr %s341, 8
        %s343 = scalar_lea.vmem %s4, %s342
        %p345 = scmp.eq.s32.totalorder %s41, 0
        // Predicated region
        $region49: #{tpu_custom_call.1} parent=47 // pred_check
          %p346 = pneg %p345
        $region50: #{tpu_custom_call.1} parent=47 // pred_check_branch
          %348 = sbr.rel (%p346) target = $region52
        $region51: #{tpu_custom_call.1} parent=47 // pred_region
          %vm349 = vcmask 261120
          %350 = vst.msk [vmem:[#allocation2] sm:$0xff] %vm349, 0.0
          %351 = vst.msk [vmem:[#allocation2 + $0x8] sm:$0xff] %vm349, 0.0
          %vm352 = vcmask 7168
          %353 = vst.msk [vmem:[#allocation3] sm:$0xff] %vm352, 0.0
          %354 = vst.msk [vmem:[#allocation3 + $0x8] sm:$0xff] %vm352, 0.0
          %355 = vst [vmem:[%s328] sm:$0xff] 0.0
          %356 = vst [vmem:[%s328 + $0x8] sm:$0xff] 0.0
          %v357 = vld [vmem:[%s5 + $0x6] sm:$0x1]
          %v358 = vlaneseq
          %v359 = vshrl.u32 %v358, 7
          %v360 = vlaneseq
          %v361 = vand.u32 %v360, 127
          %vm362 = vcmp.eq.s32.totalorder %v359, %v361
          %v363 = vld [vmem:[%s343] sm:$0xff]
          %vm364 = vcmp.gt.f32.partialorder %v363, 0.0
          %vm365 = vmor %vm364, %vm362
          %v366 = vsel %vm365, 0.0, -1e+09
          %v367 = vperm.slane %v363, 0
          %v368 = vlaneseq
          %v369 = vshrl.u32 %v368, 7
          %371 = vset.pattern.permute.xlu0 %v369
          %372 = vperm.xlu0 %371, %v367
          %v373 = vpop.permute.xlu0 %372
          %v374 = vperm.slane %v363, 1
          %v375 = vlaneseq
          %v376 = vshrl.u32 %v375, 7
          %378 = vset.pattern.permute.xlu0 %v376
          %379 = vperm.xlu0 %378, %v374
          %v380 = vpop.permute.xlu0 %379
          %v381 = vperm.slane %v363, 2
          %v382 = vlaneseq
          %v383 = vshrl.u32 %v382, 7
          %385 = vset.pattern.permute.xlu0 %v383
          %386 = vperm.xlu0 %385, %v381
          %v387 = vpop.permute.xlu0 %386
          %v388 = vperm.slane %v363, 3
          %v389 = vlaneseq
          %v390 = vshrl.u32 %v389, 7
          %392 = vset.pattern.permute.xlu0 %v390
          %393 = vperm.xlu0 %392, %v388
          %v394 = vpop.permute.xlu0 %393
          %v395 = vperm.slane %v363, 4
          %v396 = vlaneseq
          %v397 = vshrl.u32 %v396, 7
          %399 = vset.pattern.permute.xlu0 %v397
          %400 = vperm.xlu0 %399, %v395
          %v401 = vpop.permute.xlu0 %400
          %v402 = vperm.slane %v363, 5
          %v403 = vlaneseq
          %v404 = vshrl.u32 %v403, 7
          %406 = vset.pattern.permute.xlu0 %v404
          %407 = vperm.xlu0 %406, %v402
          %v408 = vpop.permute.xlu0 %407
          %v409 = vperm.slane %v363, 6
          %v410 = vlaneseq
          %v411 = vshrl.u32 %v410, 7
          %413 = vset.pattern.permute.xlu0 %v411
          %414 = vperm.xlu0 %413, %v409
          %v415 = vpop.permute.xlu0 %414
          %v416 = vperm.slane %v363, 7
          %v417 = vlaneseq
          %v418 = vshrl.u32 %v417, 7
          %420 = vset.pattern.permute.xlu0 %v418
          %421 = vperm.xlu0 %420, %v416
          %v422 = vpop.permute.xlu0 %421
          %v423 = vperm.slane %v357, 0
          %v424 = vmul.f32 %v373, %v423
          %v425 = vmul.f32 %v380, %v423
          %v426 = vmul.f32 %v387, %v423
          %v427 = vmul.f32 %v394, %v423
          %v428 = vmul.f32 %v401, %v423
          %v429 = vmul.f32 %v408, %v423
          %v430 = vmul.f32 %v415, %v423
          %v431 = vmul.f32 %v422, %v423
          %v432 = vperm.slane %v366, 0
          %v433 = vlaneseq
          %v434 = vshrl.u32 %v433, 7
          %436 = vset.pattern.permute.xlu0 %v434
          %437 = vperm.xlu0 %436, %v432
          %v438 = vpop.permute.xlu0 %437
          %v439 = vperm.slane %v366, 1
          %v440 = vlaneseq
          %v441 = vshrl.u32 %v440, 7
          %443 = vset.pattern.permute.xlu0 %v441
          %444 = vperm.xlu0 %443, %v439
          %v445 = vpop.permute.xlu0 %444
          %v446 = vperm.slane %v366, 2
          %v447 = vlaneseq
          %v448 = vshrl.u32 %v447, 7
          %450 = vset.pattern.permute.xlu0 %v448
          %451 = vperm.xlu0 %450, %v446
          %v452 = vpop.permute.xlu0 %451
          %v453 = vperm.slane %v366, 3
          %v454 = vlaneseq
          %v455 = vshrl.u32 %v454, 7
          %457 = vset.pattern.permute.xlu0 %v455
          %458 = vperm.xlu0 %457, %v453
          %v459 = vpop.permute.xlu0 %458
          %v460 = vperm.slane %v366, 4
          %v461 = vlaneseq
          %v462 = vshrl.u32 %v461, 7
          %464 = vset.pattern.permute.xlu0 %v462
          %465 = vperm.xlu0 %464, %v460
          %v466 = vpop.permute.xlu0 %465
          %v467 = vperm.slane %v366, 5
          %v468 = vlaneseq
          %v469 = vshrl.u32 %v468, 7
          %471 = vset.pattern.permute.xlu0 %v469
          %472 = vperm.xlu0 %471, %v467
          %v473 = vpop.permute.xlu0 %472
          %v474 = vperm.slane %v366, 6
          %v475 = vlaneseq
          %v476 = vshrl.u32 %v475, 7
          %478 = vset.pattern.permute.xlu0 %v476
          %479 = vperm.xlu0 %478, %v474
          %v480 = vpop.permute.xlu0 %479
          %v481 = vperm.slane %v366, 7
          %v482 = vlaneseq
          %v483 = vshrl.u32 %v482, 7
          %485 = vset.pattern.permute.xlu0 %v483
          %486 = vperm.xlu0 %485, %v481
          %v487 = vpop.permute.xlu0 %486
          %v488 = vadd.f32 %v424, %v438
          %v489 = vadd.f32 %v425, %v445
          %v490 = vadd.f32 %v426, %v452
          %v491 = vadd.f32 %v427, %v459
          %v492 = vadd.f32 %v428, %v466
          %v493 = vadd.f32 %v429, %v473
          %v494 = vadd.f32 %v430, %v480
          %v495 = vadd.f32 %v431, %v487
          %496 = vst.msk [vmem:[#allocation4] sm:$0xff] %vm349, %v488
          %497 = vst.msk [vmem:[#allocation4 + $0x8] sm:$0xff] %vm349, %v489
          %498 = vst.msk [vmem:[#allocation4 + $0x10] sm:$0xff] %vm349, %v490
          %499 = vst.msk [vmem:[#allocation4 + $0x18] sm:$0xff] %vm349, %v491
          %500 = vst.msk [vmem:[#allocation4 + $0x20] sm:$0xff] %vm349, %v492
          %501 = vst.msk [vmem:[#allocation4 + $0x28] sm:$0xff] %vm349, %v493
          %502 = vst.msk [vmem:[#allocation4 + $0x30] sm:$0xff] %vm349, %v494
          %503 = vst.msk [vmem:[#allocation4 + $0x38] sm:$0xff] %vm349, %v495
          %s504 = scalar_lea.vmem %s343, 8
          %v505 = vld [vmem:[%s504] sm:$0xff]
          %vm506 = vcmp.gt.f32.partialorder %v505, 0.0
          %vm507 = vmor %vm506, %vm362
          %v508 = vsel %vm507, 0.0, -1e+09
          %v509 = vperm.slane %v505, 0
          %v510 = vlaneseq
          %v511 = vshrl.u32 %v510, 7
          %513 = vset.pattern.permute.xlu0 %v511
          %514 = vperm.xlu0 %513, %v509
          %v515 = vpop.permute.xlu0 %514
          %v516 = vperm.slane %v505, 1
          %v517 = vlaneseq
          %v518 = vshrl.u32 %v517, 7
          %520 = vset.pattern.permute.xlu0 %v518
          %521 = vperm.xlu0 %520, %v516
          %v522 = vpop.permute.xlu0 %521
          %v523 = vperm.slane %v505, 2
          %v524 = vlaneseq
          %v525 = vshrl.u32 %v524, 7
          %527 = vset.pattern.permute.xlu0 %v525
          %528 = vperm.xlu0 %527, %v523
          %v529 = vpop.permute.xlu0 %528
          %v530 = vperm.slane %v505, 3
          %v531 = vlaneseq
          %v532 = vshrl.u32 %v531, 7
          %534 = vset.pattern.permute.xlu0 %v532
          %535 = vperm.xlu0 %534, %v530
          %v536 = vpop.permute.xlu0 %535
          %v537 = vperm.slane %v505, 4
          %v538 = vlaneseq
          %v539 = vshrl.u32 %v538, 7
          %541 = vset.pattern.permute.xlu0 %v539
          %542 = vperm.xlu0 %541, %v537
          %v543 = vpop.permute.xlu0 %542
          %v544 = vperm.slane %v505, 5
          %v545 = vlaneseq
          %v546 = vshrl.u32 %v545, 7
          %548 = vset.pattern.permute.xlu0 %v546
          %549 = vperm.xlu0 %548, %v544
          %v550 = vpop.permute.xlu0 %549
          %v551 = vperm.slane %v505, 6
          %v552 = vlaneseq
          %v553 = vshrl.u32 %v552, 7
          %555 = vset.pattern.permute.xlu0 %v553
          %556 = vperm.xlu0 %555, %v551
          %v557 = vpop.permute.xlu0 %556
          %v558 = vperm.slane %v505, 7
          %v559 = vlaneseq
          %v560 = vshrl.u32 %v559, 7
          %562 = vset.pattern.permute.xlu0 %v560
          %563 = vperm.xlu0 %562, %v558
          %v564 = vpop.permute.xlu0 %563
          %v565 = vmul.f32 %v515, %v423
          %v566 = vmul.f32 %v522, %v423
          %v567 = vmul.f32 %v529, %v423
          %v568 = vmul.f32 %v536, %v423
          %v569 = vmul.f32 %v543, %v423
          %v570 = vmul.f32 %v550, %v423
          %v571 = vmul.f32 %v557, %v423
          %v572 = vmul.f32 %v564, %v423
          %v573 = vperm.slane %v508, 0
          %v574 = vlaneseq
          %v575 = vshrl.u32 %v574, 7
          %577 = vset.pattern.permute.xlu0 %v575
          %578 = vperm.xlu0 %577, %v573
          %v579 = vpop.permute.xlu0 %578
          %v580 = vperm.slane %v508, 1
          %v581 = vlaneseq
          %v582 = vshrl.u32 %v581, 7
          %584 = vset.pattern.permute.xlu0 %v582
          %585 = vperm.xlu0 %584, %v580
          %v586 = vpop.permute.xlu0 %585
          %v587 = vperm.slane %v508, 2
          %v588 = vlaneseq
          %v589 = vshrl.u32 %v588, 7
          %591 = vset.pattern.permute.xlu0 %v589
          %592 = vperm.xlu0 %591, %v587
          %v593 = vpop.permute.xlu0 %592
          %v594 = vperm.slane %v508, 3
          %v595 = vlaneseq
          %v596 = vshrl.u32 %v595, 7
          %598 = vset.pattern.permute.xlu0 %v596
          %599 = vperm.xlu0 %598, %v594
          %v600 = vpop.permute.xlu0 %599
          %v601 = vperm.slane %v508, 4
          %v602 = vlaneseq
          %v603 = vshrl.u32 %v602, 7
          %605 = vset.pattern.permute.xlu0 %v603
          %606 = vperm.xlu0 %605, %v601
          %v607 = vpop.permute.xlu0 %606
          %v608 = vperm.slane %v508, 5
          %v609 = vlaneseq
          %v610 = vshrl.u32 %v609, 7
          %612 = vset.pattern.permute.xlu0 %v610
          %613 = vperm.xlu0 %612, %v608
          %v614 = vpop.permute.xlu0 %613
          %v615 = vperm.slane %v508, 6
          %v616 = vlaneseq
          %v617 = vshrl.u32 %v616, 7
          %619 = vset.pattern.permute.xlu0 %v617
          %620 = vperm.xlu0 %619, %v615
          %v621 = vpop.permute.xlu0 %620
          %v622 = vperm.slane %v508, 7
          %v623 = vlaneseq
          %v624 = vshrl.u32 %v623, 7
          %626 = vset.pattern.permute.xlu0 %v624
          %627 = vperm.xlu0 %626, %v622
          %v628 = vpop.permute.xlu0 %627
          %v629 = vadd.f32 %v565, %v579
          %v630 = vadd.f32 %v566, %v586
          %v631 = vadd.f32 %v567, %v593
          %v632 = vadd.f32 %v568, %v600
          %v633 = vadd.f32 %v569, %v607
          %v634 = vadd.f32 %v570, %v614
          %v635 = vadd.f32 %v571, %v621
          %v636 = vadd.f32 %v572, %v628
          %s637 = scalar_lea.vmem [#allocation4], 64
          %638 = vst.msk [vmem:[%s637] sm:$0xff] %vm349, %v629
          %639 = vst.msk [vmem:[%s637 + $0x8] sm:$0xff] %vm349, %v630
          %640 = vst.msk [vmem:[%s637 + $0x10] sm:$0xff] %vm349, %v631
          %641 = vst.msk [vmem:[%s637 + $0x18] sm:$0xff] %vm349, %v632
          %642 = vst.msk [vmem:[%s637 + $0x20] sm:$0xff] %vm349, %v633
          %643 = vst.msk [vmem:[%s637 + $0x28] sm:$0xff] %vm349, %v634
          %644 = vst.msk [vmem:[%s637 + $0x30] sm:$0xff] %vm349, %v635
          %645 = vst.msk [vmem:[%s637 + $0x38] sm:$0xff] %vm349, %v636
        $region52: #{tpu_custom_call.1} parent=47 // pred_fallthru
          _
        %v646 = vld [vmem:[%s333] sm:$0xff]
        %v647 = vld [vmem:[%s333 + $0x8] sm:$0xff]
        %s648 = smul.u32 %s41, 16
        %s649 = scalar_lea.vmem %s338, %s648
        %v650 = vld [vmem:[%s649] sm:$0xff]
        %v651 = vld [vmem:[%s649 + $0x8] sm:$0xff]
        %v652 = vld [vmem:[%s5] sm:$0x1]
        %v653 = vld [vmem:[%s5 + $0x1] sm:$0x1]
        %v654 = vld [vmem:[%s5 + $0x2] sm:$0x1]
        %v655 = vld [vmem:[%s5 + $0x3] sm:$0x1]
        %v656 = vld [vmem:[%s5 + $0x4] sm:$0x1]
        %v657 = vld [vmem:[%s5 + $0x5] sm:$0x1]
        %v658 = vld [vmem:[#allocation2] sm:$0xff]
        %v659 = vld [vmem:[#allocation2 + $0x8] sm:$0xff]
        %v660 = vpack.c.bf16 %v659, %v658
        %v661 = vld [vmem:[%s6] sm:$0xf]
        %v662 = vld [vmem:[%s6 + $0x4] sm:$0xf]
        %v663 = vld [vmem:[%s6 + $0x8] sm:$0xf]
        %v664 = vld [vmem:[%s6 + $0xc] sm:$0xf]
        %v669 = vunpack.c.l.b16 %v661
        %v670 = vunpack.c.l.b16 %v662
        %v671 = vunpack.c.l.b16 %v663
        %v672 = vunpack.c.l.b16 %v664
        %v673 = vpack.c.b16 %v670, %v669
        %v674 = vpack.c.b16 %v672, %v671
        %vm677 = vcmask 261120
        %v679 = vsel %vm677, %v660, 0
        %681 = vmatpush.bf16.msra.mxu0 0
        %682 = vmatpush.bf16.msra.mxu0 0
        %683 = vmatpush.bf16.msra.mxu0 0
        %684 = vmatpush.bf16.msra.mxu0 0
        %685 = vmatpush.bf16.msra.mxu0 0
        %686 = vmatpush.bf16.msra.mxu0 0
        %687 = vmatpush.bf16.msra.mxu0 %v674
        %688 = vmatpush.bf16.msra.mxu0 %v673
        %689 = vmatmul.bf16.gmra.mxu0 %v679
        %v690 = vpop.f32.mrf.mxu0
        %v691 = vadd.f32 0.0, %v690
        %v692 = vpop.f32.mrf.mxu0
        %v693 = vadd.f32 0.0, %v692
        %694 = vdwg.mxu0
        %696 = vset.pattern.permute.xlu0 0
        %697 = vperm.xlu0 %696, %v646
        %v698 = vpop.permute.xlu0 %697
        %701 = vset.pattern.permute.xlu0 0
        %702 = vperm.xlu0 %701, %v647
        %v703 = vpop.permute.xlu0 %702
        %v705 = vperm.slane %v652, 0
        %v706 = vmul.f32 %v698, %v705
        %v707 = vmul.f32 %v703, %v705
        %709 = vset.pattern.permute.xlu0 0
        %710 = vperm.xlu0 %709, %v650
        %v711 = vpop.permute.xlu0 %710
        %714 = vset.pattern.permute.xlu0 0
        %715 = vperm.xlu0 %714, %v651
        %v716 = vpop.permute.xlu0 %715
        %v718 = vperm.slane %v653, 0
        %v719 = vmul.f32 %v711, %v718
        %v720 = vmul.f32 %v716, %v718
        %v721 = vadd.f32 %v706, %v719
        %v722 = vadd.f32 %v707, %v720
        %v723 = vadd.f32 %v721, %v691
        %v724 = vadd.f32 %v722, %v693
        %v725 = vperm.slane %v654, 0
        %v726 = vmul.f32 %v698, %v725
        %v727 = vmul.f32 %v703, %v725
        %v728 = vperm.slane %v655, 0
        %v729 = vmul.f32 %v711, %v728
        %v730 = vmul.f32 %v716, %v728
        %v731 = vadd.f32 %v726, %v729
        %v732 = vadd.f32 %v727, %v730
        %735 = vrot.lane.b32.xlu0 %v691, 96
        %v736 = vpop.permute.xlu0 %735
        %737 = vrot.lane.b32.xlu0 %v693, 96
        %v738 = vpop.permute.xlu0 %737
        %v741 = vadd.f32 %v731, %v736
        %v742 = vadd.f32 %v732, %v738
        %v743 = vperm.slane %v656, 0
        %v744 = vmul.f32 %v698, %v743
        %v745 = vmul.f32 %v703, %v743
        %v746 = vperm.slane %v657, 0
        %v747 = vmul.f32 %v711, %v746
        %v748 = vmul.f32 %v716, %v746
        %v749 = vadd.f32 %v744, %v747
        %v750 = vadd.f32 %v745, %v748
        %751 = vrot.lane.b32.xlu0 %v691, 64
        %v752 = vpop.permute.xlu0 %751
        %753 = vrot.lane.b32.xlu0 %v693, 64
        %v754 = vpop.permute.xlu0 %753
        %v757 = vadd.f32 %v749, %v752
        %v758 = vadd.f32 %v750, %v754
        %v760 = vrot.slane %v741, 1
        %v761 = vrot.slane %v741, 2
        %v762 = vrot.slane %v741, 3
        %v763 = vrot.slane %v741, 4
        %v764 = vrot.slane %v741, 5
        %v765 = vrot.slane %v741, 6
        %v766 = vrot.slane %v741, 7
        %v767 = vld [vmem:[#allocation4] sm:$0xff]
        %v768 = vld [vmem:[#allocation4 + $0x8] sm:$0xff]
        %v769 = vld [vmem:[#allocation4 + $0x10] sm:$0xff]
        %v770 = vld [vmem:[#allocation4 + $0x18] sm:$0xff]
        %v771 = vld [vmem:[#allocation4 + $0x20] sm:$0xff]
        %v772 = vld [vmem:[#allocation4 + $0x28] sm:$0xff]
        %v773 = vld [vmem:[#allocation4 + $0x30] sm:$0xff]
        %v774 = vld [vmem:[#allocation4 + $0x38] sm:$0xff]
        %v775 = vperm.slane %v741, 0
        %v776 = vperm.slane %v760, 0
        %v777 = vperm.slane %v761, 0
        %v778 = vperm.slane %v762, 0
        %v779 = vperm.slane %v763, 0
        %v780 = vperm.slane %v764, 0
        %v781 = vperm.slane %v765, 0
        %v782 = vperm.slane %v766, 0
        %v791 = vadd.f32 %v775, %v767
        %v792 = vadd.f32 %v776, %v768
        %v793 = vadd.f32 %v777, %v769
        %v794 = vadd.f32 %v778, %v770
        %v795 = vadd.f32 %v779, %v771
        %v796 = vadd.f32 %v780, %v772
        %v797 = vadd.f32 %v781, %v773
        %v798 = vadd.f32 %v782, %v774
        %v799 = vsel %vm677, %v791, -inf
        %v800 = vsel %vm677, %v792, -inf
        %v801 = vsel %vm677, %v793, -inf
        %v802 = vsel %vm677, %v794, -inf
        %v803 = vsel %vm677, %v795, -inf
        %v804 = vmax.f32 %v799, %v803
        %v805 = vsel %vm677, %v796, -inf
        %v806 = vmax.f32 %v800, %v805
        %v807 = vsel %vm677, %v797, -inf
        %v808 = vmax.f32 %v801, %v807
        %v809 = vsel %vm677, %v798, -inf
        %v810 = vmax.f32 %v802, %v809
        %v811 = vmax.f32 %v804, %v806
        %v812 = vmax.f32 %v808, %v810
        %v813 = vmax.f32 %v811, %v812
        %v815 = vrot.slane %v742, 1
        %v816 = vrot.slane %v742, 2
        %v817 = vrot.slane %v742, 3
        %v818 = vrot.slane %v742, 4
        %v819 = vrot.slane %v742, 5
        %v820 = vrot.slane %v742, 6
        %v821 = vrot.slane %v742, 7
        %s822 = scalar_lea.vmem [#allocation4], 64
        %v823 = vld [vmem:[%s822] sm:$0xff]
        %v824 = vld [vmem:[%s822 + $0x8] sm:$0xff]
        %v825 = vld [vmem:[%s822 + $0x10] sm:$0xff]
        %v826 = vld [vmem:[%s822 + $0x18] sm:$0xff]
        %v827 = vld [vmem:[%s822 + $0x20] sm:$0xff]
        %v828 = vld [vmem:[%s822 + $0x28] sm:$0xff]
        %v829 = vld [vmem:[%s822 + $0x30] sm:$0xff]
        %v830 = vld [vmem:[%s822 + $0x38] sm:$0xff]
        %v831 = vperm.slane %v742, 0
        %v832 = vperm.slane %v815, 0
        %v833 = vperm.slane %v816, 0
        %v834 = vperm.slane %v817, 0
        %v835 = vperm.slane %v818, 0
        %v836 = vperm.slane %v819, 0
        %v837 = vperm.slane %v820, 0
        %v838 = vperm.slane %v821, 0
        %v847 = vadd.f32 %v831, %v823
        %v848 = vadd.f32 %v832, %v824
        %v849 = vadd.f32 %v833, %v825
        %v850 = vadd.f32 %v834, %v826
        %v851 = vadd.f32 %v835, %v827
        %v852 = vadd.f32 %v836, %v828
        %v853 = vadd.f32 %v837, %v829
        %v854 = vadd.f32 %v838, %v830
        %v855 = vsel %vm677, %v847, -inf
        %v856 = vsel %vm677, %v848, -inf
        %v857 = vsel %vm677, %v849, -inf
        %v858 = vsel %vm677, %v850, -inf
        %v859 = vsel %vm677, %v851, -inf
        %v860 = vmax.f32 %v855, %v859
        %v861 = vsel %vm677, %v852, -inf
        %v862 = vmax.f32 %v856, %v861
        %v863 = vsel %vm677, %v853, -inf
        %v864 = vmax.f32 %v857, %v863
        %v865 = vsel %vm677, %v854, -inf
        %v866 = vmax.f32 %v858, %v865
        %v867 = vmax.f32 %v860, %v862
        %v868 = vmax.f32 %v864, %v866
        %v869 = vmax.f32 %v867, %v868
        %v870 = vadd.f32 %v723, %v813
        %v871 = vadd.f32 %v724, %v869
        %v872 = vpack.c.bf16 %v871, %v870
        %v873 = vld [vmem:[%s7] sm:$0xf]
        %v874 = vld [vmem:[%s7 + $0x4] sm:$0xf]
        %v875 = vld [vmem:[%s7 + $0x8] sm:$0xf]
        %v876 = vld [vmem:[%s7 + $0xc] sm:$0xf]
        %v881 = vunpack.c.l.b16 %v873
        %v882 = vunpack.c.l.b16 %v874
        %v883 = vunpack.c.l.b16 %v875
        %v884 = vunpack.c.l.b16 %v876
        %v885 = vpack.c.b16 %v882, %v881
        %v886 = vpack.c.b16 %v884, %v883
        %v890 = vsel %vm677, %v872, 0
        %892 = vmatpush.bf16.msra.mxu0 0
        %893 = vmatpush.bf16.msra.mxu0 0
        %894 = vmatpush.bf16.msra.mxu0 0
        %895 = vmatpush.bf16.msra.mxu0 0
        %896 = vmatpush.bf16.msra.mxu0 0
        %897 = vmatpush.bf16.msra.mxu0 0
        %898 = vmatpush.bf16.msra.mxu0 %v886
        %899 = vmatpush.bf16.msra.mxu0 %v885
        %900 = vmatmul.bf16.gmra.mxu0 %v890
        %v901 = vpop.f32.mrf.mxu0
        %v902 = vadd.f32 0.0, %v901
        %v903 = vpop.f32.mrf.mxu0
        %v904 = vadd.f32 0.0, %v903
        %905 = vdwg.mxu0
        %v906 = vadd.f32 %v757, %v902
        %v907 = vadd.f32 %v758, %v904
        %v908 = vmax.f32 %v906, 0.0
        %v909 = vmax.f32 %v907, 0.0
        %v910 = vpack.c.bf16 %v909, %v908
        %v911 = vld [vmem:[%s8] sm:$0xf]
        %v912 = vld [vmem:[%s8 + $0x4] sm:$0xf]
        %v913 = vld [vmem:[%s8 + $0x8] sm:$0xf]
        %v914 = vld [vmem:[%s8 + $0xc] sm:$0xf]
        %v919 = vunpack.c.l.b16 %v911
        %v920 = vunpack.c.l.b16 %v912
        %v921 = vunpack.c.l.b16 %v913
        %v922 = vunpack.c.l.b16 %v914
        %v923 = vpack.c.b16 %v920, %v919
        %v924 = vpack.c.b16 %v922, %v921
        %v928 = vsel %vm677, %v910, 0
        %930 = vmatpush.bf16.msra.mxu0 0
        %931 = vmatpush.bf16.msra.mxu0 0
        %932 = vmatpush.bf16.msra.mxu0 0
        %933 = vmatpush.bf16.msra.mxu0 0
        %934 = vmatpush.bf16.msra.mxu0 0
        %935 = vmatpush.bf16.msra.mxu0 0
        %936 = vmatpush.bf16.msra.mxu0 %v924
        %937 = vmatpush.bf16.msra.mxu0 %v923
        %938 = vmatmul.bf16.gmra.mxu0 %v928
        %v939 = vpop.f32.mrf.mxu0
        %v940 = vadd.f32 0.0, %v939
        %v941 = vpop.f32.mrf.mxu0
        %v942 = vadd.f32 0.0, %v941
        %943 = vdwg.mxu0
        %s944 = sld [smem:[#allocation7]]
        %v945 = vstv %s944
        %v946 = vmul.f32 %v945, %v646
        %v947 = vmul.f32 %v945, %v647
        %s948 = sld [smem:[#allocation7 + $0x1]]
        %v949 = vstv %s948
        %v950 = vmul.f32 %v949, %v650
        %v951 = vmul.f32 %v949, %v651
        %v952 = vadd.f32 %v946, %v950
        %v953 = vadd.f32 %v947, %v951
        %954 = vrot.lane.b32.xlu0 %v691, 32
        %v955 = vpop.permute.xlu0 %954
        %956 = vrot.lane.b32.xlu0 %v693, 32
        %v957 = vpop.permute.xlu0 %956
        %v960 = vadd.f32 %v952, %v955
        %v961 = vadd.f32 %v953, %v957
        %v962 = vadd.f32 %v960, %v940
        %v963 = vadd.f32 %v961, %v942
        %s964 = sld [smem:[#allocation7 + $0x2]]
        %v965 = vstv %s964
        %v966 = vmul.f32 %v965, %v646
        %v967 = vmul.f32 %v965, %v647
        %s968 = sld [smem:[#allocation7 + $0x3]]
        %v969 = vstv %s968
        %v970 = vmul.f32 %v969, %v650
        %v971 = vmul.f32 %v969, %v651
        %v972 = vadd.f32 %v966, %v970
        %v973 = vadd.f32 %v967, %v971
        %974 = vrot.lane.b32.xlu0 %v691, 31
        %v975 = vpop.permute.xlu0 %974
        %976 = vrot.lane.b32.xlu0 %v693, 31
        %v977 = vpop.permute.xlu0 %976
        %v980 = vadd.f32 %v972, %v975
        %v981 = vadd.f32 %v973, %v977
        %984 = vrot.lane.b32.xlu0 %v940, 127
        %v985 = vpop.permute.xlu0 %984
        %986 = vrot.lane.b32.xlu0 %v942, 127
        %v987 = vpop.permute.xlu0 %986
        %v990 = vadd.f32 %v980, %v985
        %v991 = vadd.f32 %v981, %v987
        %s992 = sadd.s32 %s41, 1
        %s993 = scvt.s32.f32 %s992
        %s994 = smul.u32 %s40, 2
        %s995 = sld [smem:[#allocation6 + %s994]]
        %p996 = scmp.gt.f32.partialorder %s995, %s993
        %s997 = scalar_select %p996, 1, 0
        %s998 = scvt.s32.f32 %s997
        %s999 = scalar_select %p345, 1.0, %s998
        %v1000 = vstv %s999
        %v1001 = vmul.f32 %v1000, %v962
        %s1002 = ssub.f32 1.0, %s999
        %v1003 = vld [vmem:[#allocation3] sm:$0xff]
        %v1004 = vstv %s1002
        %v1005 = vmul.f32 %v1004, %v1003
        %v1006 = vadd.f32 %v1001, %v1005
        %vm1007 = vcmask 7168
        %1008 = vst.msk [vmem:[#allocation3] sm:$0xff] %vm1007, %v1006
        %s1009 = sadd.s32 %s994, 1
        %s1010 = sld [smem:[#allocation6 + %s1009]]
        %p1011 = scmp.gt.f32.partialorder %s1010, %s993
        %s1012 = scalar_select %p1011, 1, 0
        %s1013 = scvt.s32.f32 %s1012
        %s1014 = scalar_select %p345, 1.0, %s1013
        %v1015 = vstv %s1014
        %v1016 = vmul.f32 %v1015, %v963
        %s1017 = ssub.f32 1.0, %s1014
        %v1018 = vld [vmem:[#allocation3 + $0x8] sm:$0xff]
        %v1019 = vstv %s1017
        %v1020 = vmul.f32 %v1019, %v1018
        %v1021 = vadd.f32 %v1016, %v1020
        %1022 = vst.msk [vmem:[#allocation3 + $0x8] sm:$0xff] %vm1007, %v1021
        %1023 = vst.msk [vmem:[#allocation2] sm:$0xff] %vm677, %v908
        %1024 = vst.msk [vmem:[#allocation2 + $0x8] sm:$0xff] %vm677, %v909
        %v1025 = vlaneseq
        %v1026 = vand.u32 %v1025, 127
        %v1027 = vld [vmem:[%s328] sm:$0xff]
        %v1028 = vld [vmem:[%s328 + $0x8] sm:$0xff]
        %v1029 = vstv %s41
        %vm1030 = vcmp.eq.s32.totalorder %v1026, %v1029
        %1032 = vset.pattern.permute.xlu0 0
        %1033 = vperm.xlu0 %1032, %v990
        %v1034 = vpop.permute.xlu0 %1033
        %1037 = vset.pattern.permute.xlu0 0
        %1038 = vperm.xlu0 %1037, %v991
        %v1039 = vpop.permute.xlu0 %1038
        %v1041 = vsel %vm1030, %v1034, %v1027
        %v1042 = vsel %vm1030, %v1039, %v1028
        %s1043 = sadd.s32 %s41, 3
        %v1044 = vstv %s1043
        %vm1045 = vcmp.eq.s32.totalorder %v1026, %v1044
        %v1046 = vld [vmem:[#allocation3] sm:$0xff]
        %v1047 = vld [vmem:[#allocation3 + $0x8] sm:$0xff]
        %1049 = vset.pattern.permute.xlu0 0
        %1050 = vperm.xlu0 %1049, %v1046
        %v1051 = vpop.permute.xlu0 %1050
        %1054 = vset.pattern.permute.xlu0 0
        %1055 = vperm.xlu0 %1054, %v1047
        %v1056 = vpop.permute.xlu0 %1055
        %v1058 = vsel %vm1045, %v1051, %v1041
        %v1059 = vsel %vm1045, %v1056, %v1042
        %1060 = vst [vmem:[%s328] sm:$0xff] %v1058
        %1061 = vst [vmem:[%s328 + $0x8] sm:$0xff] %v1059
        %s1062 = sand.u32 %s218, 1
        %s1063 = scalar_lea.sflag [#allocation9], %s1062
        %s1064 = sand.u32 %s218, 1
        %s1065 = smul.addr %s1064, 16
        %s1066 = scalar_lea.vmem [#allocation8], %s1065
        // Predicated region
        $region53: #{tpu_custom_call.1} parent=47 // pred_check
          %p1067 = pneg %p228
        $region54: #{tpu_custom_call.1} parent=47 // pred_check_branch
          %1069 = sbr.rel (%p1067) target = $region56
        $region55: #{tpu_custom_call.1} parent=47 // pred_region
          %1071 = vsyncadd %s1063, 0
          %s1072 = smul.addr %s40, 2
          %s1073 = smul.addr %s1072, 8
          %s1074 = scalar_lea.hbm %s9, %s1073
          %s1075 = sshll.u32 %s1066, 4
          %s1076 = int_to_ptr.vmem [resolvable:$true] %s1075
          %s1077 = sshll.u32 %s1074, 4
          %s1078 = int_to_ptr.hbm [resolvable:$true] %s1077
          %1083 = dma.vmem_to_hbm [thread:$0]  %s1076, 256, %s1078, %s1063, 128, 128, 8
        $region56: #{tpu_custom_call.1} parent=47 // pred_fallthru
          _
      $region48: #{tpu_custom_call.1} parent=5 // pred_fallthru
        _
      %p1084 = scmp.le.s32.totalorder 2, %s31
      // Predicated region
      $region57: #{tpu_custom_call.1} parent=5 // pred_check
        %p1085 = pneg %p1084
      $region58: #{tpu_custom_call.1} parent=5 // pred_check_branch
        %1087 = sbr.rel (%p1085) target = $region60
      $region59: #{tpu_custom_call.1} parent=5 // pred_region
        %s1088 = ssub.s32 %s31, 2
        // Predicated region
        $region61: #{tpu_custom_call.1} parent=59 // pred_check
          %p1089 = pneg %p234
        $region62: #{tpu_custom_call.1} parent=59 // pred_check_branch
          %1091 = sbr.rel (%p1089) target = $region64
        $region63: #{tpu_custom_call.1} parent=59 // pred_region
          %s1092 = sand.u32 %s219, 1
          %s1093 = scalar_lea.sflag [#allocation9], %s1092
          %s1094 = sand.u32 %s219, 1
          %s1095 = smul.addr %s1094, 16
          %s1096 = scalar_lea.vmem [#allocation8], %s1095
          %1098 = dma.done %s1093, 256
        $region64: #{tpu_custom_call.1} parent=59 // pred_fallthru
          _
      $region60: #{tpu_custom_call.1} parent=5 // pred_fallthru
        _
    $region6: #{tpu_custom_call.1} parent=1 // loop_footer
      %s35 = sadd.s32 1, %s31
    $region7: #{tpu_custom_call.1} parent=1 // loop_footer_branch
      %30 = sbr.rel target = $region3
    $region8: #{tpu_custom_call.1} parent=1 // loop_exit
      _
    %1099 = vsyncpa [#allocation9], 1
    %s1100 = scalar_lea.sflag [#allocation9], 1
    %1101 = vsyncpa %s1100, 1

</llo_original>
